<compile_context>
chip_gen: v5e
topology: v5e:2x2
jax: 0.10.0
libtpu: 0.0.40
codegen_flags: <defaults>
</compile_context>

<pallas_src>
import functools

import jax
import jax.numpy as jnp
import numpy as np
from jax import lax
from jax.experimental import pallas as pl
from jax.experimental.pallas import tpu as pltpu


def _round_up(x, m):
    return ((x + m - 1) // m) * m


def _chip_config():
    """Generation-aware tile sizes and scoped-VMEM budget.

    The weight tiles are re-streamed once per (pass, row tile), so the weight
    stream's arithmetic intensity is exactly row_tile flops/byte; row_tile must
    sit at/above the chip's machine balance (v6e ~656, v7x ~600, v5e ~240).
    """
    kind = ""
    try:
        kind = jax.devices()[0].device_kind.lower()
    except Exception:
        pass
    if "v7" in kind:
        # 64 MiB VMEM per TensorCore -> leave headroom for f32 intermediates.
        return dict(row_tile=640, v_tile=512, vmem_bytes=52 * 1024 * 1024)
    if "v6" in kind:
        return dict(row_tile=768, v_tile=512, vmem_bytes=104 * 1024 * 1024)
    if "v5" in kind:
        # v5e is compute-limited here; larger v_tile -> fewer pipeline steps.
        return dict(row_tile=384, v_tile=2048, vmem_bytes=100 * 1024 * 1024)
    # Conservative default for unknown / older chips.
    return dict(row_tile=512, v_tile=512, vmem_bytes=64 * 1024 * 1024)


def _jsd_kernel(tgt_ref, s_in_ref, t_in_ref, s_w_ref, t_w_ref, s_b_ref, t_b_ref,
                out_ref, acc_ref, *,
                n_tokens, v_actual, row_tile, v_tile,
                weight_hard, weight_soft, beta, ignore_index, temperature,
                mask_vocab, mask_rows):
    i = pl.program_id(0)          # row tile
    p = pl.program_id(1)          # 0 = stats pass, 1 = loss pass
    v = pl.program_id(2)          # vocab tile
    nv = pl.num_programs(2)

    neg_big = jnp.float32(-1e30)

    # Consolidated per-row statistics: one (row_tile, 8) f32 scratch buffer, one
    # lane-column per statistic (static .at[] slices are free Ref views).
    s_max = acc_ref.at[:, 0:1]
    t_max = acc_ref.at[:, 1:2]
    s_sum = acc_ref.at[:, 2:3]
    t_sum = acc_ref.at[:, 3:4]
    tgt_acc = acc_ref.at[:, 4:5]
    soft_acc = acc_ref.at[:, 5:6]
    s_sum_raw = acc_ref.at[:, 6:7]

    # ---- logits tile (recomputed on both passes): bf16 MXU, f32 accumulate ----
    s_logits = jnp.dot(s_in_ref[...], s_w_ref[...],
                       preferred_element_type=jnp.float32) + s_b_ref[...]
    t_logits = jnp.dot(t_in_ref[...], t_w_ref[...],
                       preferred_element_type=jnp.float32) + t_b_ref[...]
    if temperature == 1.0:
        s_scaled, t_scaled = s_logits, t_logits
    else:
        inv_t = jnp.float32(1.0 / temperature)
        s_scaled, t_scaled = s_logits * inv_t, t_logits * inv_t

    # lane ids are always needed (target-logit gather); validity masks only when the
    # vocab / token dims are actually padded (known at trace time).
    lane_ids = lax.broadcasted_iota(jnp.int32, (row_tile, v_tile), 1) + v * v_tile
    v_valid = (lane_ids < v_actual) if mask_vocab else None
    if mask_rows:
        row_ids = lax.broadcasted_iota(jnp.int32, (row_tile, 1), 0) + i * row_tile
        row_valid = row_ids < n_tokens
    else:
        row_valid = None

    @pl.when((p == 0) & (v == 0))
    def _init():
        # cols 0,1 (running maxes) -> -inf-ish, remaining stats -> 0, in one store.
        col = lax.broadcasted_iota(jnp.int32, acc_ref.shape, 1)
        acc_ref[...] = jnp.where(col < 2, neg_big, jnp.float32(0.0))

    @pl.when(p == 0)
    def _stats():
        if mask_vocab:
            s_t = jnp.where(v_valid, s_scaled, neg_big)
            t_t = jnp.where(v_valid, t_scaled, neg_big)
        else:
            s_t, t_t = s_scaled, t_scaled
        s_m_old, t_m_old = s_max[...], t_max[...]
        s_m_new = jnp.maximum(s_m_old, jnp.max(s_t, axis=-1, keepdims=True))
        t_m_new = jnp.maximum(t_m_old, jnp.max(t_t, axis=-1, keepdims=True))
        s_sum[...] = (s_sum[...] * jnp.exp(s_m_old - s_m_new)
                      + jnp.sum(jnp.exp(s_t - s_m_new), axis=-1, keepdims=True))
        t_sum[...] = (t_sum[...] * jnp.exp(t_m_old - t_m_new)
                      + jnp.sum(jnp.exp(t_t - t_m_new), axis=-1, keepdims=True))
        if temperature != 1.0:
            # running sum-exp of the *unscaled* student logits for the CE term
            # (unscaled max == temperature * scaled max, since temperature > 0).
            s_sum_raw[...] = (s_sum_raw[...] * jnp.exp(temperature * (s_m_old - s_m_new))
                              + jnp.sum(jnp.exp(temperature * (s_t - s_m_new)),
                                        axis=-1, keepdims=True))
        s_max[...] = s_m_new
        t_max[...] = t_m_new
        # gather the (scaled) target logit straight from the logits tile
        onehot = lane_ids == tgt_ref[...]
        tgt_acc[...] += jnp.sum(jnp.where(onehot, s_scaled, 0.0),
                                axis=-1, keepdims=True)

    @pl.when(p == 1)
    def _loss():
        s_lp = s_scaled - (s_max[...] + jnp.log(s_sum[...]))
        t_lp = t_scaled - (t_max[...] + jnp.log(t_sum[...]))
        p_s = jnp.exp(s_lp)
        p_t = jnp.exp(t_lp)
        if beta == 0.0:       # Liger special case: forward KL
            contrib = p_t * (t_lp - s_lp)
        elif beta == 1.0:     # Liger special case: reverse KL
            contrib = p_s * (s_lp - t_lp)
        else:
            m_lp = jnp.log((1.0 - beta) * p_s + beta * p_t)
            contrib = (beta * (p_t * (t_lp - m_lp))
                       + (1.0 - beta) * (p_s * (s_lp - m_lp)))
        if mask_vocab and mask_rows:
            contrib = jnp.where(v_valid & row_valid, contrib, 0.0)
        elif mask_vocab:
            contrib = jnp.where(v_valid, contrib, 0.0)
        elif mask_rows:
            contrib = jnp.where(row_valid, contrib, 0.0)
        soft_acc[...] += jnp.sum(contrib, axis=-1, keepdims=True)

    @pl.when((p == 1) & (v == nv - 1))
    def _finalize():
        # NOTE: out block is resident across (p, v) and written back exactly once per
        # row tile here; keep this invariant if the out index_map ever changes.
        tgt = tgt_ref[...]
        take = tgt != ignore_index
        if mask_rows:
            take = take & row_valid
        if temperature == 1.0:
            tgt_lp = tgt_acc[...] - (s_max[...] + jnp.log(s_sum[...]))
        else:
            tgt_lp = (temperature * (tgt_acc[...] - s_max[...])
                      - jnp.log(s_sum_raw[...]))
        hard = jnp.sum(jnp.where(take, -tgt_lp, 0.0), keepdims=True)       # (1, 1)
        soft = jnp.sum(soft_acc[...], keepdims=True)                       # (1, 1)
        partial = (weight_hard * hard + weight_soft * soft) * jnp.float32(1.0 / n_tokens)
        lane = lax.broadcasted_iota(jnp.int32, out_ref.shape, 1)
        out_ref[...] = jnp.where(lane == 0, partial, 0.0)


def prepare_jsd_lm_head(student_weight, teacher_weight,
                        student_bias=None, teacher_bias=None, *, v_tile=None):
    """One-time LM-head preprocessing: cast to bf16, transpose, pad the vocab dim.

    Cache the returned dict across training steps so the (V, H) f32 -> (H, V_pad)
    bf16 HBM rewrite (several GB at real LM-head sizes, x2 models) is not paid on
    every forward call.
    """
    V, _ = student_weight.shape
    assert teacher_weight.shape[0] == V
    if v_tile is None:
        v_tile = _chip_config()["v_tile"]
    v_tile = min(int(v_tile), _round_up(V, 128))
    v_pad = _round_up(V, v_tile)

    def prep_w(w):
        return jnp.pad(jnp.asarray(w, jnp.bfloat16).T, ((0, 0), (0, v_pad - V)))

    def prep_b(b):
        b = jnp.zeros((V,), jnp.float32) if b is None else jnp.asarray(b, jnp.float32)
        return jnp.pad(b, (0, v_pad - V)).reshape(1, v_pad)

    return dict(s_wT=prep_w(student_weight), t_wT=prep_w(teacher_weight),
                s_b=prep_b(student_bias), t_b=prep_b(teacher_bias),
                v_actual=int(V), v_tile=int(v_tile))


def liger_lm_head_jsd(student_input, teacher_input, target,
                      student_weight=None, teacher_weight=None,
                      student_bias=None, teacher_bias=None, *,
                      weight_hard_loss=0.5, weight_soft_loss=0.5,
                      beta=0.5, ignore_index=-100, temperature=1.0,
                      prepared=None, row_tile=None, v_tile=None,
                      vmem_limit_bytes=None, single_buffer_activations=False):
    N, Hs = student_input.shape
    N2, Ht = teacher_input.shape
    assert N == N2

    cfg = _chip_config()
    if row_tile is None:
        row_tile = cfg["row_tile"]
    if vmem_limit_bytes is None:
        vmem_limit_bytes = cfg["vmem_bytes"]

    # Hoisted weight prep: callers should build `prepared` once via
    # prepare_jsd_lm_head() and reuse it across steps.
    if prepared is None:
        prepared = prepare_jsd_lm_head(student_weight, teacher_weight,
                                       student_bias, teacher_bias, v_tile=v_tile)
    s_wT, t_wT = prepared["s_wT"], prepared["t_wT"]
    s_b, t_b = prepared["s_b"], prepared["t_b"]
    V = prepared["v_actual"]
    v_tile = prepared["v_tile"]
    v_pad = s_wT.shape[1]
    assert s_wT.shape[0] == Hs and t_wT.shape[0] == Ht
    assert v_pad % v_tile == 0

    row_tile = min(int(row_tile), _round_up(N, 8))
    n_pad = _round_up(N, row_tile)
    nrt = n_pad // row_tile
    nvt = v_pad // v_tile

    s_in = jnp.pad(jnp.asarray(student_input, jnp.bfloat16), ((0, n_pad - N), (0, 0)))
    t_in = jnp.pad(jnp.asarray(teacher_input, jnp.bfloat16), ((0, n_pad - N), (0, 0)))
    tgt = jnp.pad(jnp.asarray(target, jnp.int32), (0, n_pad - N),
                  constant_values=ignore_index).reshape(n_pad, 1)

    mask_vocab = v_pad != V            # trace-time mask elision for full tiles
    mask_rows = n_pad != N

    kernel = functools.partial(
        _jsd_kernel,
        n_tokens=int(N), v_actual=int(V),
        row_tile=int(row_tile), v_tile=int(v_tile),
        weight_hard=float(weight_hard_loss), weight_soft=float(weight_soft_loss),
        beta=float(beta), ignore_index=int(ignore_index),
        temperature=float(temperature),
        mask_vocab=bool(mask_vocab), mask_rows=bool(mask_rows),
    )

    # Targets/activations only change on a row-tile boundary (once per 2*nvt steps);
    # on VMEM-tight chips they can be single-buffered to reclaim VMEM headroom.
    act_mode = pl.Buffered(1) if single_buffer_activations else None

    partials = pl.pallas_call(
        kernel,
        out_shape=jax.ShapeDtypeStruct((nrt, 128), jnp.float32),
        grid_spec=pltpu.PrefetchScalarGridSpec(
            num_scalar_prefetch=0,
            grid=(nrt, 2, nvt),
            in_specs=[
                pl.BlockSpec((row_tile, 1), lambda i, p, v: (i, 0),
                             pipeline_mode=act_mode),                    # targets
                pl.BlockSpec((row_tile, Hs), lambda i, p, v: (i, 0),
                             pipeline_mode=act_mode),                    # student acts
                pl.BlockSpec((row_tile, Ht), lambda i, p, v: (i, 0),
                             pipeline_mode=act_mode),                    # teacher acts
                pl.BlockSpec((Hs, v_tile), lambda i, p, v: (0, v)),      # student W^T
                pl.BlockSpec((Ht, v_tile), lambda i, p, v: (0, v)),      # teacher W^T
                pl.BlockSpec((1, v_tile), lambda i, p, v: (0, v)),       # student bias
                pl.BlockSpec((1, v_tile), lambda i, p, v: (0, v)),       # teacher bias
            ],
            out_specs=pl.BlockSpec((1, 128), lambda i, p, v: (i, 0)),
            scratch_shapes=[pltpu.VMEM((row_tile, 8), jnp.float32)],
        ),
        compiler_params=pltpu.CompilerParams(
            dimension_semantics=("parallel", "arbitrary", "arbitrary"),
            vmem_limit_bytes=int(vmem_limit_bytes),
        ),
    )(tgt, s_in, t_in, s_wT, t_wT, s_b, t_b)
    # lane 0 of each row holds that row tile's (already weighted & normalized) partial.
    return jnp.sum(partials)


# ------------------------------- references -------------------------------------
def _reference_tail(s_logits, t_logits, target, weight_hard_loss, weight_soft_loss,
                    beta, ignore_index, temperature):
    n = target.shape[0]
    s_lp_ce = jax.nn.log_softmax(s_logits, axis=-1)
    valid = target != ignore_index
    tgt_safe = jnp.where(valid, target, 0)
    picked = jnp.take_along_axis(s_lp_ce, tgt_safe[:, None], axis=-1)[:, 0]
    hard = -jnp.sum(jnp.where(valid, picked, 0.0)) / n
    s_lp = jax.nn.log_softmax(s_logits / temperature, axis=-1)
    t_lp = jax.nn.log_softmax(t_logits / temperature, axis=-1)
    if beta == 0.0:
        jsd = jnp.sum(jnp.exp(t_lp) * (t_lp - s_lp))
    elif beta == 1.0:
        jsd = jnp.sum(jnp.exp(s_lp) * (s_lp - t_lp))
    else:
        m_lp = jnp.log((1.0 - beta) * jnp.exp(s_lp) + beta * jnp.exp(t_lp))
        jsd = (beta * jnp.sum(jnp.exp(t_lp) * (t_lp - m_lp))
               + (1.0 - beta) * jnp.sum(jnp.exp(s_lp) * (s_lp - m_lp)))
    soft = jsd / n
    return weight_hard_loss * hard + weight_soft_loss * soft


def _reference_f32(student_input, teacher_input, target, sw, tw, sb, tb,
                   weight_hard_loss=0.5, weight_soft_loss=0.5,
                   beta=0.5, ignore_index=-100, temperature=1.0):
    s_logits = jnp.dot(student_input, sw.T, precision=lax.Precision.HIGHEST) + sb
    t_logits = jnp.dot(teacher_input, tw.T, precision=lax.Precision.HIGHEST) + tb
    return _reference_tail(s_logits, t_logits, target, weight_hard_loss,
                           weight_soft_loss, beta, ignore_index, temperature)


def _reference_bf16(student_input, teacher_input, target, sw, tw, sb, tb,
                    weight_hard_loss=0.5, weight_soft_loss=0.5,
                    beta=0.5, ignore_index=-100, temperature=1.0):
    s_logits = jnp.dot(student_input.astype(jnp.bfloat16), sw.astype(jnp.bfloat16).T,
                       preferred_element_type=jnp.float32) + sb
    t_logits = jnp.dot(teacher_input.astype(jnp.bfloat16), tw.astype(jnp.bfloat16).T,
                       preferred_element_type=jnp.float32) + tb
    return _reference_tail(s_logits, t_logits, target, weight_hard_loss,
                           weight_soft_loss, beta, ignore_index, temperature)


def _run_case(N, Hs, Ht, V, *, seed, whard, wsoft, beta, temperature, ignore_index=-100):
    key = jax.random.PRNGKey(seed)
    k1, k2, k3, k4, k5, k6, k7 = jax.random.split(key, 7)
    student_input = jax.random.normal(k1, (N, Hs), jnp.float32)
    teacher_input = jax.random.normal(k2, (N, Ht), jnp.float32)
    target = jax.random.randint(k3, (N,), 0, V, jnp.int32)
    target = target.at[0].set(ignore_index).at[N - 1].set(ignore_index)
    bs = 1.0 / float(np.sqrt(Hs))
    bt = 1.0 / float(np.sqrt(Ht))
    student_weight = jax.random.uniform(k4, (V, Hs), jnp.float32, -bs, bs)
    student_bias = jax.random.uniform(k5, (V,), jnp.float32, -bs, bs)
    teacher_weight = jax.random.uniform(k6, (V, Ht), jnp.float32, -bt, bt)
    teacher_bias = jax.random.uniform(k7, (V,), jnp.float32, -bt, bt)

    # Weight prep hoisted out of the step (cache this across steps in real use).
    prepared = prepare_jsd_lm_head(student_weight, teacher_weight,
                                   student_bias, teacher_bias)
    loss = liger_lm_head_jsd(student_input, teacher_input, target,
                             student_weight, teacher_weight,
                             student_bias, teacher_bias,
                             weight_hard_loss=whard, weight_soft_loss=wsoft,
                             beta=beta, ignore_index=ignore_index,
                             temperature=temperature, prepared=prepared)
    loss = jax.block_until_ready(loss)
    assert np.isfinite(float(loss))

    ref_bf16 = jax.block_until_ready(_reference_bf16(
        student_input, teacher_input, target, student_weight, teacher_weight,
        student_bias, teacher_bias, whard, wsoft, beta, ignore_index, temperature))
    np.testing.assert_allclose(float(loss), float(ref_bf16), rtol=2e-3, atol=2e-3)

    ref_f32 = jax.block_until_ready(_reference_f32(
        student_input, teacher_input, target, student_weight, teacher_weight,
        student_bias, teacher_bias, whard, wsoft, beta, ignore_index, temperature))
    np.testing.assert_allclose(float(loss), float(ref_f32), rtol=2e-2, atol=2e-2)
    return float(loss)


if __name__ == "__main__":
    # Case 1: aligned shapes (N = B*T tokens, teacher hidden H, student hidden H//2).
    B, T, H, V = 4, 8, 64, 256
    _run_case(B * T, H // 2, H, V, seed=0,
              whard=0.5, wsoft=0.5, beta=0.5, temperature=1.0)

    # Case 2: unaligned vocab/rows (exercises the padding-mask paths), beta=0 special
    # case (forward KL) and temperature != 1.
    _run_case(30, 32, 64, 200, seed=1,
              whard=0.4, wsoft=0.6, beta=0.0, temperature=2.0)

    print("KERNEL_OK")
</pallas_src>

<mosaic_0001>
module attributes {stable_mosaic.version = 11 : i64} {
  func.func @_jsd_kernel(%arg0: i32, %arg1: i32, %arg2: i32, %arg3: memref<32x1xi32, #tpu.memory_space<vmem>>, %arg4: memref<32x32xbf16, #tpu.memory_space<vmem>>, %arg5: memref<32x64xbf16, #tpu.memory_space<vmem>>, %arg6: memref<32x256xbf16, #tpu.memory_space<vmem>>, %arg7: memref<64x256xbf16, #tpu.memory_space<vmem>>, %arg8: memref<1x256xf32, #tpu.memory_space<vmem>>, %arg9: memref<1x256xf32, #tpu.memory_space<vmem>>, %arg10: memref<1x128xf32, #tpu.memory_space<vmem>>, %arg11: memref<32x8xf32, #tpu.memory_space<vmem>>) attributes {dimension_semantics = [#tpu.dimension_semantics<parallel>, #tpu.dimension_semantics<arbitrary>, #tpu.dimension_semantics<arbitrary>], iteration_bounds = array<i64: 1, 2, 1>, scalar_prefetch = 0 : i64, scratch_operands = 1 : i64, tpu.core_type = #tpu.core_type<tc>, window_params = [{transform_indices = @transform_0, window_bounds = array<i64: 32, 1>}, {transform_indices = @transform_1, window_bounds = array<i64: 32, 32>}, {transform_indices = @transform_2, window_bounds = array<i64: 32, 64>}, {transform_indices = @transform_3, window_bounds = array<i64: 32, 256>}, {transform_indices = @transform_4, window_bounds = array<i64: 64, 256>}, {transform_indices = @transform_5, window_bounds = array<i64: 1, 256>}, {transform_indices = @transform_6, window_bounds = array<i64: 1, 256>}, {transform_indices = @transform_7, window_bounds = array<i64: 1, 128>}]} {
    %c0 = arith.constant 0 : index
    %c0_0 = arith.constant 0 : index
    %0 = vector.load %arg4[%c0, %c0_0] : memref<32x32xbf16, #tpu.memory_space<vmem>>, vector<32x32xbf16>
    %c0_1 = arith.constant 0 : index
    %c0_2 = arith.constant 0 : index
    %1 = vector.load %arg6[%c0_1, %c0_2] : memref<32x256xbf16, #tpu.memory_space<vmem>>, vector<32x256xbf16>
    %cst = arith.constant dense<0.000000e+00> : vector<32x256xf32>
    %2 = tpu.matmul %0, %1, %cst {dimension_numbers = #tpu.dot_dimension_numbers<[1], [0], [0], [1], [0, 0, 1, 1], [], []>} : vector<32x32xbf16>, vector<32x256xbf16>, vector<32x256xf32> -> vector<32x256xf32>
    %c0_3 = arith.constant 0 : index
    %c0_4 = arith.constant 0 : index
    %3 = vector.load %arg8[%c0_3, %c0_4] : memref<1x256xf32, #tpu.memory_space<vmem>>, vector<1x256xf32>
    %4 = vector.broadcast %3 : vector<1x256xf32> to vector<32x256xf32>
    %5 = arith.addf %2, %4 : vector<32x256xf32>
    %c0_5 = arith.constant 0 : index
    %c0_6 = arith.constant 0 : index
    %6 = vector.load %arg5[%c0_5, %c0_6] : memref<32x64xbf16, #tpu.memory_space<vmem>>, vector<32x64xbf16>
    %c0_7 = arith.constant 0 : index
    %c0_8 = arith.constant 0 : index
    %7 = vector.load %arg7[%c0_7, %c0_8] : memref<64x256xbf16, #tpu.memory_space<vmem>>, vector<64x256xbf16>
    %cst_9 = arith.constant dense<0.000000e+00> : vector<32x256xf32>
    %8 = tpu.matmul %6, %7, %cst_9 {dimension_numbers = #tpu.dot_dimension_numbers<[1], [0], [0], [1], [0, 0, 1, 1], [], []>} : vector<32x64xbf16>, vector<64x256xbf16>, vector<32x256xf32> -> vector<32x256xf32>
    %c0_10 = arith.constant 0 : index
    %c0_11 = arith.constant 0 : index
    %9 = vector.load %arg9[%c0_10, %c0_11] : memref<1x256xf32, #tpu.memory_space<vmem>>, vector<1x256xf32>
    %10 = vector.broadcast %9 : vector<1x256xf32> to vector<32x256xf32>
    %11 = arith.addf %8, %10 : vector<32x256xf32>
    %12 = tpu.iota {dimensions = array<i32: 1>} : vector<32x256xi32>
    %c256_i32 = arith.constant 256 : i32
    %13 = arith.muli %arg2, %c256_i32 : i32
    %14 = vector.broadcast %13 : i32 to vector<32x256xi32>
    %15 = arith.addi %12, %14 : vector<32x256xi32>
    %c0_i32 = arith.constant 0 : i32
    %16 = arith.cmpi eq, %arg1, %c0_i32 : i32
    %c0_i32_12 = arith.constant 0 : i32
    %17 = arith.cmpi eq, %arg2, %c0_i32_12 : i32
    %18 = arith.andi %16, %17 : i1
    %19 = arith.extui %18 : i1 to i32
    %cst_13 = arith.constant -1.000000e+30 : f32
    %c0_i32_14 = arith.constant 0 : i32
    %20 = arith.cmpi ne, %19, %c0_i32_14 : i32
    scf.if %20 {
      %32 = tpu.iota {dimensions = array<i32: 1>} : vector<32x8xi32>
      %c2_i32 = arith.constant 2 : i32
      %33 = vector.broadcast %c2_i32 : i32 to vector<32x8xi32>
      %34 = arith.cmpi slt, %32, %33 : vector<32x8xi32>
      %cst_21 = arith.constant 0.000000e+00 : f32
      %35 = vector.broadcast %cst_13 : f32 to vector<32x8xf32>
      %36 = vector.broadcast %cst_21 : f32 to vector<32x8xf32>
      %37 = arith.select %34, %35, %36 : vector<32x8xi1>, vector<32x8xf32>
      %c0_22 = arith.constant 0 : index
      %c0_23 = arith.constant 0 : index
      %38 = vector.load %arg11[%c0_22, %c0_23] : memref<32x8xf32, #tpu.memory_space<vmem>>, vector<32x8xf32>
      tpu.vector_store %arg11[%c0_22, %c0_23], %37 {strides = array<i32>} : memref<32x8xf32, #tpu.memory_space<vmem>>, vector<32x8xf32>,
    } else {
    }
    %c0_i32_15 = arith.constant 0 : i32
    %21 = arith.cmpi eq, %arg1, %c0_i32_15 : i32
    %22 = arith.extui %21 : i1 to i32
    %c0_i32_16 = arith.constant 0 : i32
    %23 = arith.cmpi ne, %22, %c0_i32_16 : i32
    scf.if %23 {
      %c0_21 = arith.constant 0 : index
      %c0_22 = arith.constant 0 : index
      %32 = vector.load %arg11[%c0_21, %c0_22] : memref<32x8xf32, #tpu.memory_space<vmem>>, vector<32x1xf32>
      %c0_23 = arith.constant 0 : index
      %c1 = arith.constant 1 : index
      %33 = vector.load %arg11[%c0_23, %c1] : memref<32x8xf32, #tpu.memory_space<vmem>>, vector<32x1xf32>
      %cst_24 = arith.constant dense<0xFF800000> : vector<32xf32>
      %34 = vector.multi_reduction <maximumf>, %5, %cst_24 [1] : vector<32x256xf32> to vector<32xf32>
      %35 = vector.shape_cast %34 : vector<32xf32> to vector<32x1xf32>
      %36 = arith.maximumf %32, %35 : vector<32x1xf32>
      %cst_25 = arith.constant dense<0xFF800000> : vector<32xf32>
      %37 = vector.multi_reduction <maximumf>, %11, %cst_25 [1] : vector<32x256xf32> to vector<32xf32>
      %38 = vector.shape_cast %37 : vector<32xf32> to vector<32x1xf32>
      %39 = arith.maximumf %33, %38 : vector<32x1xf32>
      %c0_26 = arith.constant 0 : index
      %c2 = arith.constant 2 : index
      %40 = vector.load %arg11[%c0_26, %c2] : memref<32x8xf32, #tpu.memory_space<vmem>>, vector<32x1xf32>
      %41 = arith.subf %32, %36 : vector<32x1xf32>
      %42 = math.exp %41 : vector<32x1xf32>
      %43 = arith.mulf %40, %42 : vector<32x1xf32>
      %44 = vector.broadcast %36 : vector<32x1xf32> to vector<32x256xf32>
      %45 = arith.subf %5, %44 : vector<32x256xf32>
      %46 = math.exp %45 : vector<32x256xf32>
      %cst_27 = arith.constant dense<0.000000e+00> : vector<32xf32>
      %47 = vector.multi_reduction <add>, %46, %cst_27 [1] : vector<32x256xf32> to vector<32xf32>
      %48 = vector.shape_cast %47 : vector<32xf32> to vector<32x1xf32>
      %49 = arith.addf %43, %48 : vector<32x1xf32>
      %c0_28 = arith.constant 0 : index
      %c2_29 = arith.constant 2 : index
      %50 = vector.load %arg11[%c0_28, %c2_29] : memref<32x8xf32, #tpu.memory_space<vmem>>, vector<32x1xf32>
      tpu.vector_store %arg11[%c0_28, %c2_29], %49 {strides = array<i32>} : memref<32x8xf32, #tpu.memory_space<vmem>>, vector<32x1xf32>,
      %c0_30 = arith.constant 0 : index
      %c3 = arith.constant 3 : index
      %51 = vector.load %arg11[%c0_30, %c3] : memref<32x8xf32, #tpu.memory_space<vmem>>, vector<32x1xf32>
      %52 = arith.subf %33, %39 : vector<32x1xf32>
      %53 = math.exp %52 : vector<32x1xf32>
      %54 = arith.mulf %51, %53 : vector<32x1xf32>
      %55 = vector.broadcast %39 : vector<32x1xf32> to vector<32x256xf32>
      %56 = arith.subf %11, %55 : vector<32x256xf32>
      %57 = math.exp %56 : vector<32x256xf32>
      %cst_31 = arith.constant dense<0.000000e+00> : vector<32xf32>
      %58 = vector.multi_reduction <add>, %57, %cst_31 [1] : vector<32x256xf32> to vector<32xf32>
      %59 = vector.shape_cast %58 : vector<32xf32> to vector<32x1xf32>
      %60 = arith.addf %54, %59 : vector<32x1xf32>
      %c0_32 = arith.constant 0 : index
      %c3_33 = arith.constant 3 : index
      %61 = vector.load %arg11[%c0_32, %c3_33] : memref<32x8xf32, #tpu.memory_space<vmem>>, vector<32x1xf32>
      tpu.vector_store %arg11[%c0_32, %c3_33], %60 {strides = array<i32>} : memref<32x8xf32, #tpu.memory_space<vmem>>, vector<32x1xf32>,
      %c0_34 = arith.constant 0 : index
      %c0_35 = arith.constant 0 : index
      %62 = vector.load %arg11[%c0_34, %c0_35] : memref<32x8xf32, #tpu.memory_space<vmem>>, vector<32x1xf32>
      tpu.vector_store %arg11[%c0_34, %c0_35], %36 {strides = array<i32>} : memref<32x8xf32, #tpu.memory_space<vmem>>, vector<32x1xf32>,
      %c0_36 = arith.constant 0 : index
      %c1_37 = arith.constant 1 : index
      %63 = vector.load %arg11[%c0_36, %c1_37] : memref<32x8xf32, #tpu.memory_space<vmem>>, vector<32x1xf32>
      tpu.vector_store %arg11[%c0_36, %c1_37], %39 {strides = array<i32>} : memref<32x8xf32, #tpu.memory_space<vmem>>, vector<32x1xf32>,
      %c0_38 = arith.constant 0 : index
      %c0_39 = arith.constant 0 : index
      %64 = vector.load %arg3[%c0_38, %c0_39] : memref<32x1xi32, #tpu.memory_space<vmem>>, vector<32x1xi32>
      %65 = vector.broadcast %64 : vector<32x1xi32> to vector<32x256xi32>
      %66 = arith.cmpi eq, %15, %65 : vector<32x256xi32>
      %c0_40 = arith.constant 0 : index
      %c4 = arith.constant 4 : index
      %67 = vector.load %arg11[%c0_40, %c4] : memref<32x8xf32, #tpu.memory_space<vmem>>, vector<32x1xf32>
      %cst_41 = arith.constant 0.000000e+00 : f32
      %68 = vector.broadcast %cst_41 : f32 to vector<32x256xf32>
      %69 = arith.select %66, %5, %68 : vector<32x256xi1>, vector<32x256xf32>
      %cst_42 = arith.constant dense<0.000000e+00> : vector<32xf32>
      %70 = vector.multi_reduction <add>, %69, %cst_42 [1] : vector<32x256xf32> to vector<32xf32>
      %71 = vector.shape_cast %70 : vector<32xf32> to vector<32x1xf32>
      %72 = arith.addf %67, %71 : vector<32x1xf32>
      %c0_43 = arith.constant 0 : index
      %c4_44 = arith.constant 4 : index
      %73 = vector.load %arg11[%c0_43, %c4_44] : memref<32x8xf32, #tpu.memory_space<vmem>>, vector<32x1xf32>
      tpu.vector_store %arg11[%c0_43, %c4_44], %72 {strides = array<i32>} : memref<32x8xf32, #tpu.memory_space<vmem>>, vector<32x1xf32>,
    } else {
    }
    %c1_i32 = arith.constant 1 : i32
    %24 = arith.cmpi eq, %arg1, %c1_i32 : i32
    %25 = arith.extui %24 : i1 to i32
    %c0_i32_17 = arith.constant 0 : i32
    %26 = arith.cmpi ne, %25, %c0_i32_17 : i32
    scf.if %26 {
      %c0_21 = arith.constant 0 : index
      %c0_22 = arith.constant 0 : index
      %32 = vector.load %arg11[%c0_21, %c0_22] : memref<32x8xf32, #tpu.memory_space<vmem>>, vector<32x1xf32>
      %c0_23 = arith.constant 0 : index
      %c2 = arith.constant 2 : index
      %33 = vector.load %arg11[%c0_23, %c2] : memref<32x8xf32, #tpu.memory_space<vmem>>, vector<32x1xf32>
      %34 = math.log %33 : vector<32x1xf32>
      %35 = arith.addf %32, %34 : vector<32x1xf32>
      %36 = vector.broadcast %35 : vector<32x1xf32> to vector<32x256xf32>
      %37 = arith.subf %5, %36 : vector<32x256xf32>
      %c0_24 = arith.constant 0 : index
      %c1 = arith.constant 1 : index
      %38 = vector.load %arg11[%c0_24, %c1] : memref<32x8xf32, #tpu.memory_space<vmem>>, vector<32x1xf32>
      %c0_25 = arith.constant 0 : index
      %c3 = arith.constant 3 : index
      %39 = vector.load %arg11[%c0_25, %c3] : memref<32x8xf32, #tpu.memory_space<vmem>>, vector<32x1xf32>
      %40 = math.log %39 : vector<32x1xf32>
      %41 = arith.addf %38, %40 : vector<32x1xf32>
      %42 = vector.broadcast %41 : vector<32x1xf32> to vector<32x256xf32>
      %43 = arith.subf %11, %42 : vector<32x256xf32>
      %44 = math.exp %37 : vector<32x256xf32>
      %45 = math.exp %43 : vector<32x256xf32>
      %cst_26 = arith.constant 5.000000e-01 : f32
      %46 = vector.broadcast %cst_26 : f32 to vector<32x256xf32>
      %47 = arith.mulf %46, %44 : vector<32x256xf32>
      %cst_27 = arith.constant 5.000000e-01 : f32
      %48 = vector.broadcast %cst_27 : f32 to vector<32x256xf32>
      %49 = arith.mulf %48, %45 : vector<32x256xf32>
      %50 = arith.addf %47, %49 : vector<32x256xf32>
      %51 = math.log %50 : vector<32x256xf32>
      %52 = arith.subf %43, %51 : vector<32x256xf32>
      %53 = arith.mulf %45, %52 : vector<32x256xf32>
      %cst_28 = arith.constant 5.000000e-01 : f32
      %54 = vector.broadcast %cst_28 : f32 to vector<32x256xf32>
      %55 = arith.mulf %54, %53 : vector<32x256xf32>
      %56 = arith.subf %37, %51 : vector<32x256xf32>
      %57 = arith.mulf %44, %56 : vector<32x256xf32>
      %cst_29 = arith.constant 5.000000e-01 : f32
      %58 = vector.broadcast %cst_29 : f32 to vector<32x256xf32>
      %59 = arith.mulf %58, %57 : vector<32x256xf32>
      %60 = arith.addf %55, %59 : vector<32x256xf32>
      %c0_30 = arith.constant 0 : index
      %c5 = arith.constant 5 : index
      %61 = vector.load %arg11[%c0_30, %c5] : memref<32x8xf32, #tpu.memory_space<vmem>>, vector<32x1xf32>
      %cst_31 = arith.constant dense<0.000000e+00> : vector<32xf32>
      %62 = vector.multi_reduction <add>, %60, %cst_31 [1] : vector<32x256xf32> to vector<32xf32>
      %63 = vector.shape_cast %62 : vector<32xf32> to vector<32x1xf32>
      %64 = arith.addf %61, %63 : vector<32x1xf32>
      %c0_32 = arith.constant 0 : index
      %c5_33 = arith.constant 5 : index
      %65 = vector.load %arg11[%c0_32, %c5_33] : memref<32x8xf32, #tpu.memory_space<vmem>>, vector<32x1xf32>
      tpu.vector_store %arg11[%c0_32, %c5_33], %64 {strides = array<i32>} : memref<32x8xf32, #tpu.memory_space<vmem>>, vector<32x1xf32>,
    } else {
    }
    %c1_i32_18 = arith.constant 1 : i32
    %27 = arith.cmpi eq, %arg1, %c1_i32_18 : i32
    %c0_i32_19 = arith.constant 0 : i32
    %28 = arith.cmpi eq, %arg2, %c0_i32_19 : i32
    %29 = arith.andi %27, %28 : i1
    %30 = arith.extui %29 : i1 to i32
    %c0_i32_20 = arith.constant 0 : i32
    %31 = arith.cmpi ne, %30, %c0_i32_20 : i32
    scf.if %31 {
      %c0_21 = arith.constant 0 : index
      %c0_22 = arith.constant 0 : index
      %32 = vector.load %arg3[%c0_21, %c0_22] : memref<32x1xi32, #tpu.memory_space<vmem>>, vector<32x1xi32>
      %c-100_i32 = arith.constant -100 : i32
      %33 = vector.broadcast %c-100_i32 : i32 to vector<32x1xi32>
      %34 = arith.cmpi ne, %32, %33 : vector<32x1xi32>
      %c0_23 = arith.constant 0 : index
      %c4 = arith.constant 4 : index
      %35 = vector.load %arg11[%c0_23, %c4] : memref<32x8xf32, #tpu.memory_space<vmem>>, vector<32x1xf32>
      %c0_24 = arith.constant 0 : index
      %c0_25 = arith.constant 0 : index
      %36 = vector.load %arg11[%c0_24, %c0_25] : memref<32x8xf32, #tpu.memory_space<vmem>>, vector<32x1xf32>
      %c0_26 = arith.constant 0 : index
      %c2 = arith.constant 2 : index
      %37 = vector.load %arg11[%c0_26, %c2] : memref<32x8xf32, #tpu.memory_space<vmem>>, vector<32x1xf32>
      %38 = math.log %37 : vector<32x1xf32>
      %39 = arith.addf %36, %38 : vector<32x1xf32>
      %40 = arith.subf %35, %39 : vector<32x1xf32>
      %cst_27 = arith.constant 0.000000e+00 : f32
      %41 = vector.broadcast %cst_27 : f32 to vector<32x1xf32>
      %42 = arith.subf %41, %40 : vector<32x1xf32>
      %cst_28 = arith.constant 0.000000e+00 : f32
      %43 = vector.broadcast %cst_28 : f32 to vector<32x1xf32>
      %44 = arith.select %34, %42, %43 : vector<32x1xi1>, vector<32x1xf32>
      %45 = vector.shape_cast %44 : vector<32x1xf32> to vector<1x32x1xf32>
      %cst_29 = arith.constant dense<0.000000e+00> : vector<1xf32>
      %46 = vector.multi_reduction <add>, %45, %cst_29 [1, 2] : vector<1x32x1xf32> to vector<1xf32>
      %47 = vector.shape_cast %46 : vector<1xf32> to vector<1x1x1xf32>
      %48 = vector.extract %47[0, 0, 0] : f32 from vector<1x1x1xf32>
      %49 = vector.broadcast %48 : f32 to vector<1x1xf32>
      %c0_30 = arith.constant 0 : index
      %c5 = arith.constant 5 : index
      %50 = vector.load %arg11[%c0_30, %c5] : memref<32x8xf32, #tpu.memory_space<vmem>>, vector<32x1xf32>
      %51 = vector.shape_cast %50 : vector<32x1xf32> to vector<1x32x1xf32>
      %cst_31 = arith.constant dense<0.000000e+00> : vector<1xf32>
      %52 = vector.multi_reduction <add>, %51, %cst_31 [1, 2] : vector<1x32x1xf32> to vector<1xf32>
      %53 = vector.shape_cast %52 : vector<1xf32> to vector<1x1x1xf32>
      %54 = vector.extract %53[0, 0, 0] : f32 from vector<1x1x1xf32>
      %55 = vector.broadcast %54 : f32 to vector<1x1xf32>
      %cst_32 = arith.constant 5.000000e-01 : f32
      %56 = vector.broadcast %cst_32 : f32 to vector<1x1xf32>
      %57 = arith.mulf %56, %49 : vector<1x1xf32>
      %cst_33 = arith.constant 5.000000e-01 : f32
      %58 = vector.broadcast %cst_33 : f32 to vector<1x1xf32>
      %59 = arith.mulf %58, %55 : vector<1x1xf32>
      %60 = arith.addf %57, %59 : vector<1x1xf32>
      %cst_34 = arith.constant 3.125000e-02 : f32
      %61 = vector.broadcast %cst_34 : f32 to vector<1x1xf32>
      %62 = arith.mulf %60, %61 : vector<1x1xf32>
      %63 = tpu.iota {dimensions = array<i32: 1>} : vector<1x128xi32>
      %c0_i32_35 = arith.constant 0 : i32
      %64 = vector.broadcast %c0_i32_35 : i32 to vector<1x128xi32>
      %65 = arith.cmpi eq, %63, %64 : vector<1x128xi32>
      %cst_36 = arith.constant 0.000000e+00 : f32
      %66 = vector.shape_cast %62 : vector<1x1xf32> to vector<1x1xf32>
      %67 = vector.broadcast %66 : vector<1x1xf32> to vector<1x128xf32>
      %68 = vector.broadcast %cst_36 : f32 to vector<1x128xf32>
      %69 = arith.select %65, %67, %68 : vector<1x128xi1>, vector<1x128xf32>
      %c0_37 = arith.constant 0 : index
      %c0_38 = arith.constant 0 : index
      %70 = vector.load %arg10[%c0_37, %c0_38] : memref<1x128xf32, #tpu.memory_space<vmem>>, vector<1x128xf32>
      tpu.vector_store %arg10[%c0_37, %c0_38], %69 {strides = array<i32>} : memref<1x128xf32, #tpu.memory_space<vmem>>, vector<1x128xf32>,
    } else {
    }
    return
  }
  func.func @transform_0(%arg0: i32, %arg1: i32, %arg2: i32) -> (i32, i32) {
    %c0_i32 = arith.constant 0 : i32
    %c0_i32_0 = arith.constant 0 : i32
    return %arg0, %c0_i32 : i32, i32
  }
  func.func @transform_1(%arg0: i32, %arg1: i32, %arg2: i32) -> (i32, i32) {
    %c0_i32 = arith.constant 0 : i32
    %c0_i32_0 = arith.constant 0 : i32
    return %arg0, %c0_i32 : i32, i32
  }
  func.func @transform_2(%arg0: i32, %arg1: i32, %arg2: i32) -> (i32, i32) {
    %c0_i32 = arith.constant 0 : i32
    %c0_i32_0 = arith.constant 0 : i32
    return %arg0, %c0_i32 : i32, i32
  }
  func.func @transform_3(%arg0: i32, %arg1: i32, %arg2: i32) -> (i32, i32) {
    %c0_i32 = arith.constant 0 : i32
    %c0_i32_0 = arith.constant 0 : i32
    return %c0_i32, %arg2 : i32, i32
  }
  func.func @transform_4(%arg0: i32, %arg1: i32, %arg2: i32) -> (i32, i32) {
    %c0_i32 = arith.constant 0 : i32
    %c0_i32_0 = arith.constant 0 : i32
    return %c0_i32, %arg2 : i32, i32
  }
  func.func @transform_5(%arg0: i32, %arg1: i32, %arg2: i32) -> (i32, i32) {
    %c0_i32 = arith.constant 0 : i32
    %c0_i32_0 = arith.constant 0 : i32
    return %c0_i32, %arg2 : i32, i32
  }
  func.func @transform_6(%arg0: i32, %arg1: i32, %arg2: i32) -> (i32, i32) {
    %c0_i32 = arith.constant 0 : i32
    %c0_i32_0 = arith.constant 0 : i32
    return %c0_i32, %arg2 : i32, i32
  }
  func.func @transform_7(%arg0: i32, %arg1: i32, %arg2: i32) -> (i32, i32) {
    %c0_i32 = arith.constant 0 : i32
    %c0_i32_0 = arith.constant 0 : i32
    return %arg0, %c0_i32 : i32, i32
  }
}

</mosaic_0001>

<llo_original>
// kernel: tpu_custom_call.1
$region0: #{tpu_custom_call.1}
  #allocation0 [shape = 'u32[]', space=smem, size = 0x4, offset = 0x4, fixed_abs, tag = 'smem constant byte address 0x4 - core index']
  #allocation1 [shape = 'u32[72,128]{1,0:T(1,128)}', space=vmem, size = 0x9000, scoped, tag = 'internal scratch']
  #allocation2 [shape = 'f32[32,8]{1,0:T(8,128)}', space=vmem, size = 0x4000, scoped, tag = 'scratch operand']
  %s0 = inlined_call_operand.vmem [shape: s32[32,1], index: 0, kind: input, shape index: {}]
  %s1 = inlined_call_operand.hbm [shape: bf16[32,32], index: 1, kind: input, shape index: {}]
  %s2 = inlined_call_operand.hbm [shape: bf16[32,64], index: 2, kind: input, shape index: {}]
  %s3 = inlined_call_operand.vmem [shape: bf16[32,256], index: 3, kind: input, shape index: {}]
  %s4 = inlined_call_operand.hbm [shape: bf16[64,256], index: 4, kind: input, shape index: {}]
  %s5 = inlined_call_operand.vmem [shape: f32[1,256], index: 5, kind: input, shape index: {}]
  %s6 = inlined_call_operand.vmem [shape: f32[1,256], index: 6, kind: input, shape index: {}]
  %s7 = inlined_call_operand.hbm [shape: f32[1,128], index: 7, kind: output, shape index: {}]
  %s8 = sld [smem:[#allocation0]]
  $region89: #{tpu_custom_call.1} parent=0
    _
  %s10 = ssub.s32 1, %s8
  %s11 = scalar_select 0, %s10, %s8
  $region1: #{tpu_custom_call.1} parent=0
    #allocation3 [shape = 'u8[8192]{0}', space=vmem, size = 0x2000, scoped, tag = 'input window, operand 1, single buffered']
    #allocation4 [shape = 's32[2]{0}', space=sflag, size = 0x8, scoped, tag = 'scoped memory for tpu_custom_call.1']
    #allocation5 [shape = 's32[2]{0}', space=sflag, size = 0x8, scoped, tag = 'scoped memory for tpu_custom_call.1']
    #allocation6 [shape = 'u8[8192]{0}', space=vmem, size = 0x2000, scoped, tag = 'input window, operand 2, single buffered']
    #allocation7 [shape = 's32[1]{0}', space=sflag, size = 0x4, scoped, tag = 'scoped memory for tpu_custom_call.1']
    #allocation8 [shape = 'u8[32768]{0}', space=vmem, size = 0x8000, scoped, tag = 'input window, operand 4, single buffered']
    #allocation9 [shape = 'u8[512]{0}', space=vmem, size = 0x400, scoped, tag = 'output window, operand 0, single buffered']
    %12 = vsyncpa [#allocation4], 0
    %13 = vsyncpa [#allocation7], 0
    %14 = vsyncpa [#allocation5], 0
    loop: start=0, step=1, limit=4
    $region2: #{tpu_custom_call.1} parent=1 // loop_pre_header
      _
    $region3: #{tpu_custom_call.1} parent=1 // loop_header
      %s16 = sphi 0, %s20
      %p17 = scmp.ge.s32.totalorder %s16, 4
      %s23 = sphi 0, %s42
      %s24 = sphi 0, %s38
      %s25 = sphi 0, %s34
      %s26 = sphi 0, %s23
      %s27 = sphi 0, %s24
      %s28 = sphi 0, %s25
      %s29 = sphi 0, %s26
      %s30 = sphi 0, %s27
      %s31 = sphi 0, %s28
      %s45 = sphi 0, %s47
      %s48 = sphi 0, %s45
      %s49 = sphi 0, %s48
      %s65 = sphi 0, %s49
      %s71 = sphi 0, %s73
      %s74 = sphi 0, %s71
      %s75 = sphi 0, %s74
      %s91 = sphi 0, %s75
      %s97 = sphi 0, %s99
      %s100 = sphi 0, %s97
      %s101 = sphi 0, %s100
      %s117 = sphi 0, %s101
      %s123 = sphi 0, %s125
      %s126 = sphi 0, %s123
      %s127 = sphi 0, %s126
      %s143 = sphi 0, %s127
      %s149 = sphi 0, %s151
      %s152 = sphi 0, %s149
      %s153 = sphi 0, %s152
      %s169 = sphi 0, %s153
      %s175 = sphi 0, %s177
      %s178 = sphi 0, %s175
      %s179 = sphi 0, %s178
      %s195 = sphi 0, %s179
      %s201 = sphi 0, %s203
      %s204 = sphi 0, %s201
      %s205 = sphi 0, %s204
      %s221 = sphi 0, %s205
      %s227 = sphi 0, %s229
      %s230 = sphi 0, %s227
      %s231 = sphi 0, %s230
      %s247 = sphi 0, %s231
    $region4: #{tpu_custom_call.1} parent=1 // loop_header_branch
      %19 = sbr.rel (%p17) target = $region8
    $region5: #{tpu_custom_call.1} parent=1 // loop_body
      %s21 = ssub.s32 %s16, 1
      %s22 = ssub.s32 %s16, 2
      %s32 = sadd.s32 1, %s25
      %p33 = scmp.ge.s32.totalorder %s32, 1
      %s34 = scalar_select %p33, 0, %s32
      %s35 = sadd.s32 1, %s24
      %s36 = scalar_select %p33, %s35, %s24
      %p37 = scmp.ge.s32.totalorder %s36, 2
      %s38 = scalar_select %p37, 0, %s36
      %s39 = sadd.s32 1, %s23
      %s40 = scalar_select %p37, %s39, %s23
      %p41 = scmp.ge.s32.totalorder %s40, 1
      %s42 = scalar_select %p41, 0, %s40
      %s43 = ssub.s32 %s23, %s42
      %p44 = scmp.eq.s32.totalorder %s43, 0
      %s46 = sadd.s32 %s45, 1
      %s47 = scalar_select %p44, %s45, %s46
      %p50 = pneg %p44
      %p51 = scmp.eq.s32.totalorder %s16, 1
      %p52 = por %p50, %p51
      %p53 = scmp.ne.s32.totalorder %s45, %s48
      %p54 = scmp.eq.s32.totalorder %s16, 0
      %p55 = por %p53, %p54
      %p56 = scmp.ne.s32.totalorder %s45, %s48
      %p57 = scmp.eq.s32.totalorder %s21, 1
      %p58 = por %p56, %p57
      %p59 = scmp.ne.s32.totalorder %s48, %s49
      %p60 = scmp.eq.s32.totalorder %s21, 0
      %p61 = por %p59, %p60
      %p62 = scmp.ne.s32.totalorder %s48, %s49
      %p63 = scmp.eq.s32.totalorder %s22, 1
      %p64 = por %p62, %p63
      %p66 = scmp.ne.s32.totalorder %s49, %s65
      %p67 = scmp.eq.s32.totalorder %s22, 0
      %p68 = por %p66, %p67
      %s69 = ssub.s32 %s23, %s42
      %p70 = scmp.eq.s32.totalorder %s69, 0
      %s72 = sadd.s32 %s71, 1
      %s73 = scalar_select %p70, %s71, %s72
      %p76 = pneg %p70
      %p77 = scmp.eq.s32.totalorder %s16, 1
      %p78 = por %p76, %p77
      %p79 = scmp.ne.s32.totalorder %s71, %s74
      %p80 = scmp.eq.s32.totalorder %s16, 0
      %p81 = por %p79, %p80
      %p82 = scmp.ne.s32.totalorder %s71, %s74
      %p83 = scmp.eq.s32.totalorder %s21, 1
      %p84 = por %p82, %p83
      %p85 = scmp.ne.s32.totalorder %s74, %s75
      %p86 = scmp.eq.s32.totalorder %s21, 0
      %p87 = por %p85, %p86
      %p88 = scmp.ne.s32.totalorder %s74, %s75
      %p89 = scmp.eq.s32.totalorder %s22, 1
      %p90 = por %p88, %p89
      %p92 = scmp.ne.s32.totalorder %s75, %s91
      %p93 = scmp.eq.s32.totalorder %s22, 0
      %p94 = por %p92, %p93
      %s95 = ssub.s32 %s23, %s42
      %p96 = scmp.eq.s32.totalorder %s95, 0
      %s98 = sadd.s32 %s97, 1
      %s99 = scalar_select %p96, %s97, %s98
      %p102 = pneg %p96
      %p103 = scmp.eq.s32.totalorder %s16, 1
      %p104 = por %p102, %p103
      %p105 = scmp.ne.s32.totalorder %s97, %s100
      %p106 = scmp.eq.s32.totalorder %s16, 0
      %p107 = por %p105, %p106
      %p108 = scmp.ne.s32.totalorder %s97, %s100
      %p109 = scmp.eq.s32.totalorder %s21, 1
      %p110 = por %p108, %p109
      %p111 = scmp.ne.s32.totalorder %s100, %s101
      %p112 = scmp.eq.s32.totalorder %s21, 0
      %p113 = por %p111, %p112
      %p114 = scmp.ne.s32.totalorder %s100, %s101
      %p115 = scmp.eq.s32.totalorder %s22, 1
      %p116 = por %p114, %p115
      %p118 = scmp.ne.s32.totalorder %s101, %s117
      %p119 = scmp.eq.s32.totalorder %s22, 0
      %p120 = por %p118, %p119
      %s121 = ssub.s32 %s25, %s34
      %p122 = scmp.eq.s32.totalorder %s121, 0
      %s124 = sadd.s32 %s123, 1
      %s125 = scalar_select %p122, %s123, %s124
      %p128 = pneg %p122
      %p129 = scmp.eq.s32.totalorder %s16, 1
      %p130 = por %p128, %p129
      %p131 = scmp.ne.s32.totalorder %s123, %s126
      %p132 = scmp.eq.s32.totalorder %s16, 0
      %p133 = por %p131, %p132
      %p134 = scmp.ne.s32.totalorder %s123, %s126
      %p135 = scmp.eq.s32.totalorder %s21, 1
      %p136 = por %p134, %p135
      %p137 = scmp.ne.s32.totalorder %s126, %s127
      %p138 = scmp.eq.s32.totalorder %s21, 0
      %p139 = por %p137, %p138
      %p140 = scmp.ne.s32.totalorder %s126, %s127
      %p141 = scmp.eq.s32.totalorder %s22, 1
      %p142 = por %p140, %p141
      %p144 = scmp.ne.s32.totalorder %s127, %s143
      %p145 = scmp.eq.s32.totalorder %s22, 0
      %p146 = por %p144, %p145
      %s147 = ssub.s32 %s25, %s34
      %p148 = scmp.eq.s32.totalorder %s147, 0
      %s150 = sadd.s32 %s149, 1
      %s151 = scalar_select %p148, %s149, %s150
      %p154 = pneg %p148
      %p155 = scmp.eq.s32.totalorder %s16, 1
      %p156 = por %p154, %p155
      %p157 = scmp.ne.s32.totalorder %s149, %s152
      %p158 = scmp.eq.s32.totalorder %s16, 0
      %p159 = por %p157, %p158
      %p160 = scmp.ne.s32.totalorder %s149, %s152
      %p161 = scmp.eq.s32.totalorder %s21, 1
      %p162 = por %p160, %p161
      %p163 = scmp.ne.s32.totalorder %s152, %s153
      %p164 = scmp.eq.s32.totalorder %s21, 0
      %p165 = por %p163, %p164
      %p166 = scmp.ne.s32.totalorder %s152, %s153
      %p167 = scmp.eq.s32.totalorder %s22, 1
      %p168 = por %p166, %p167
      %p170 = scmp.ne.s32.totalorder %s153, %s169
      %p171 = scmp.eq.s32.totalorder %s22, 0
      %p172 = por %p170, %p171
      %s173 = ssub.s32 %s25, %s34
      %p174 = scmp.eq.s32.totalorder %s173, 0
      %s176 = sadd.s32 %s175, 1
      %s177 = scalar_select %p174, %s175, %s176
      %p180 = pneg %p174
      %p181 = scmp.eq.s32.totalorder %s16, 1
      %p182 = por %p180, %p181
      %p183 = scmp.ne.s32.totalorder %s175, %s178
      %p184 = scmp.eq.s32.totalorder %s16, 0
      %p185 = por %p183, %p184
      %p186 = scmp.ne.s32.totalorder %s175, %s178
      %p187 = scmp.eq.s32.totalorder %s21, 1
      %p188 = por %p186, %p187
      %p189 = scmp.ne.s32.totalorder %s178, %s179
      %p190 = scmp.eq.s32.totalorder %s21, 0
      %p191 = por %p189, %p190
      %p192 = scmp.ne.s32.totalorder %s178, %s179
      %p193 = scmp.eq.s32.totalorder %s22, 1
      %p194 = por %p192, %p193
      %p196 = scmp.ne.s32.totalorder %s179, %s195
      %p197 = scmp.eq.s32.totalorder %s22, 0
      %p198 = por %p196, %p197
      %s199 = ssub.s32 %s25, %s34
      %p200 = scmp.eq.s32.totalorder %s199, 0
      %s202 = sadd.s32 %s201, 1
      %s203 = scalar_select %p200, %s201, %s202
      %p206 = pneg %p200
      %p207 = scmp.eq.s32.totalorder %s16, 1
      %p208 = por %p206, %p207
      %p209 = scmp.ne.s32.totalorder %s201, %s204
      %p210 = scmp.eq.s32.totalorder %s16, 0
      %p211 = por %p209, %p210
      %p212 = scmp.ne.s32.totalorder %s201, %s204
      %p213 = scmp.eq.s32.totalorder %s21, 1
      %p214 = por %p212, %p213
      %p215 = scmp.ne.s32.totalorder %s204, %s205
      %p216 = scmp.eq.s32.totalorder %s21, 0
      %p217 = por %p215, %p216
      %p218 = scmp.ne.s32.totalorder %s204, %s205
      %p219 = scmp.eq.s32.totalorder %s22, 1
      %p220 = por %p218, %p219
      %p222 = scmp.ne.s32.totalorder %s205, %s221
      %p223 = scmp.eq.s32.totalorder %s22, 0
      %p224 = por %p222, %p223
      %s225 = ssub.s32 %s23, %s42
      %p226 = scmp.eq.s32.totalorder %s225, 0
      %s228 = sadd.s32 %s227, 1
      %s229 = scalar_select %p226, %s227, %s228
      %p232 = pneg %p226
      %p233 = scmp.eq.s32.totalorder %s16, 1
      %p234 = por %p232, %p233
      %p235 = scmp.ne.s32.totalorder %s227, %s230
      %p236 = scmp.eq.s32.totalorder %s16, 0
      %p237 = por %p235, %p236
      %p238 = scmp.ne.s32.totalorder %s227, %s230
      %p239 = scmp.eq.s32.totalorder %s21, 1
      %p240 = por %p238, %p239
      %p241 = scmp.ne.s32.totalorder %s230, %s231
      %p242 = scmp.eq.s32.totalorder %s21, 0
      %p243 = por %p241, %p242
      %p244 = scmp.ne.s32.totalorder %s230, %s231
      %p245 = scmp.eq.s32.totalorder %s22, 1
      %p246 = por %p244, %p245
      %p248 = scmp.ne.s32.totalorder %s231, %s247
      %p249 = scmp.eq.s32.totalorder %s22, 0
      %p250 = por %p248, %p249
      %p251 = scmp.le.s32.totalorder 1, %s16
      %p252 = scmp.lt.s32.totalorder %s16, 3
      %p253 = pnand %p251, %p252
      %p254 = pneg %p253
      // Predicated region
      $region9: #{tpu_custom_call.1} parent=5 // pred_check
        _
      $region10: #{tpu_custom_call.1} parent=5 // pred_check_branch
        %256 = sbr.rel (%p253) target = $region12
      $region11: #{tpu_custom_call.1} parent=5 // pred_region
        %s257 = ssub.s32 %s16, 1
        // Predicated region
        $region13: #{tpu_custom_call.1} parent=11 // pred_check
          %p258 = pneg %p61
        $region14: #{tpu_custom_call.1} parent=11 // pred_check_branch
          %260 = sbr.rel (%p258) target = $region16
        $region15: #{tpu_custom_call.1} parent=11 // pred_region
          %s261 = smul.u32 4, %s26
          %p262 = scmp.lt.s32.totalorder %s261, 3
          %s263 = scalar_select %p262, %s261, 3
          %s264 = smul.addr %s263, 8
          %s265 = scalar_lea.vmem %s0, %s264
          %s266 = smul.u32 4, %s26
        $region16: #{tpu_custom_call.1} parent=11 // pred_fallthru
          _
        // Predicated region
        $region17: #{tpu_custom_call.1} parent=11 // pred_check
          %p267 = pneg %p87
        $region18: #{tpu_custom_call.1} parent=11 // pred_check_branch
          %269 = sbr.rel (%p267) target = $region20
        $region19: #{tpu_custom_call.1} parent=11 // pred_region
          %s270 = smul.u32 4, %s26
          %272 = vsyncadd [#allocation4], 0
          %s273 = smul.addr %s270, 4
          %s274 = scalar_lea.hbm %s1, %s273
          %s275 = sshll.u32 %s274, 4
          %s276 = int_to_ptr.hbm [resolvable:$true] %s275
          %s277 = sshll.u32 [#allocation3], 4
          %s278 = int_to_ptr.vmem [resolvable:$true] %s277
          %283 = dma.hbm_to_vmem [thread:$0]  %s276, 256, %s278, [#allocation4], 64, 64, 4
        $region20: #{tpu_custom_call.1} parent=11 // pred_fallthru
          _
        // Predicated region
        $region21: #{tpu_custom_call.1} parent=11 // pred_check
          %p284 = pneg %p113
        $region22: #{tpu_custom_call.1} parent=11 // pred_check_branch
          %286 = sbr.rel (%p284) target = $region24
        $region23: #{tpu_custom_call.1} parent=11 // pred_region
          %s287 = smul.u32 4, %s26
          %289 = vsyncadd [#allocation7], 0
          %s290 = smul.addr %s287, 4
          %s291 = scalar_lea.hbm %s2, %s290
          %s292 = sshll.u32 %s291, 4
          %s293 = int_to_ptr.hbm [resolvable:$true] %s292
          %s294 = sshll.u32 [#allocation6], 4
          %s295 = int_to_ptr.vmem [resolvable:$true] %s294
          %300 = dma.hbm_to_vmem [thread:$0]  %s293, 256, %s295, [#allocation7], 64, 64, 4
        $region24: #{tpu_custom_call.1} parent=11 // pred_fallthru
          _
        // Predicated region
        $region25: #{tpu_custom_call.1} parent=11 // pred_check
          %p301 = pneg %p139
        $region26: #{tpu_custom_call.1} parent=11 // pred_check_branch
          %303 = sbr.rel (%p301) target = $region28
        $region27: #{tpu_custom_call.1} parent=11 // pred_region
          %s304 = smul.u32 2, %s28
          %p305 = scmp.lt.s32.totalorder %s304, 1
          %s306 = scalar_select %p305, %s304, 1
          %s307 = smul.addr %s306, 4
          %s308 = scalar_lea.vmem %s3, %s307
          %s309 = smul.u32 2, %s28
        $region28: #{tpu_custom_call.1} parent=11 // pred_fallthru
          _
        // Predicated region
        $region29: #{tpu_custom_call.1} parent=11 // pred_check
          %p310 = pneg %p165
        $region30: #{tpu_custom_call.1} parent=11 // pred_check_branch
          %312 = sbr.rel (%p310) target = $region32
        $region31: #{tpu_custom_call.1} parent=11 // pred_region
          %s313 = smul.u32 2, %s28
          %315 = vsyncadd [#allocation7], 0
          %s316 = smul.addr %s313, 4
          %s317 = scalar_lea.hbm %s4, %s316
          %s318 = sshll.u32 %s317, 4
          %s319 = int_to_ptr.hbm [resolvable:$true] %s318
          %s320 = sshll.u32 [#allocation8], 4
          %s321 = int_to_ptr.vmem [resolvable:$true] %s320
          %326 = dma.hbm_to_vmem [thread:$0]  %s319, 1024, %s321, [#allocation7], 128, 128, 8
        $region32: #{tpu_custom_call.1} parent=11 // pred_fallthru
          _
        // Predicated region
        $region33: #{tpu_custom_call.1} parent=11 // pred_check
          %p327 = pneg %p191
        $region34: #{tpu_custom_call.1} parent=11 // pred_check_branch
          %329 = sbr.rel (%p327) target = $region36
        $region35: #{tpu_custom_call.1} parent=11 // pred_region
          %s330 = smul.u32 2, %s28
          %p331 = scmp.lt.s32.totalorder %s330, 1
          %s332 = scalar_select %p331, %s330, 1
          %s333 = scalar_lea.vmem %s5, %s332
          %s334 = smul.u32 2, %s28
        $region36: #{tpu_custom_call.1} parent=11 // pred_fallthru
          _
        // Predicated region
        $region37: #{tpu_custom_call.1} parent=11 // pred_check
          %p335 = pneg %p217
        $region38: #{tpu_custom_call.1} parent=11 // pred_check_branch
          %337 = sbr.rel (%p335) target = $region40
        $region39: #{tpu_custom_call.1} parent=11 // pred_region
          %s338 = smul.u32 2, %s28
          %p339 = scmp.lt.s32.totalorder %s338, 1
          %s340 = scalar_select %p339, %s338, 1
          %s341 = scalar_lea.vmem %s6, %s340
          %s342 = smul.u32 2, %s28
        $region40: #{tpu_custom_call.1} parent=11 // pred_fallthru
          _
      $region12: #{tpu_custom_call.1} parent=5 // pred_fallthru
        _
      %p343 = scmp.lt.s32.totalorder %s16, 2
      // Predicated region
      $region41: #{tpu_custom_call.1} parent=5 // pred_check
        %p344 = pneg %p343
      $region42: #{tpu_custom_call.1} parent=5 // pred_check_branch
        %346 = sbr.rel (%p344) target = $region44
      $region43: #{tpu_custom_call.1} parent=5 // pred_region
        _
      $region44: #{tpu_custom_call.1} parent=5 // pred_fallthru
        _
      %p347 = scmp.le.s32.totalorder 1, %s16
      %p348 = scmp.lt.s32.totalorder %s16, 3
      %p349 = pnand %p347, %p348
      %p350 = pneg %p349
      // Predicated region
      $region45: #{tpu_custom_call.1} parent=5 // pred_check
        _
      $region46: #{tpu_custom_call.1} parent=5 // pred_check_branch
        %352 = sbr.rel (%p349) target = $region48
      $region47: #{tpu_custom_call.1} parent=5 // pred_region
        %s353 = ssub.s32 %s16, 1
        // Predicated region
        $region49: #{tpu_custom_call.1} parent=47 // pred_check
          %p354 = pneg %p87
        $region50: #{tpu_custom_call.1} parent=47 // pred_check_branch
          %356 = sbr.rel (%p354) target = $region52
        $region51: #{tpu_custom_call.1} parent=47 // pred_region
          %358 = dma.done [#allocation4], 256
        $region52: #{tpu_custom_call.1} parent=47 // pred_fallthru
          _
        // Predicated region
        $region53: #{tpu_custom_call.1} parent=47 // pred_check
          %p359 = pneg %p113
        $region54: #{tpu_custom_call.1} parent=47 // pred_check_branch
          %361 = sbr.rel (%p359) target = $region56
        $region55: #{tpu_custom_call.1} parent=47 // pred_region
          %363 = dma.done [#allocation7], 256
        $region56: #{tpu_custom_call.1} parent=47 // pred_fallthru
          _
        // Predicated region
        $region57: #{tpu_custom_call.1} parent=47 // pred_check
          %p364 = pneg %p165
        $region58: #{tpu_custom_call.1} parent=47 // pred_check_branch
          %366 = sbr.rel (%p364) target = $region60
        $region59: #{tpu_custom_call.1} parent=47 // pred_region
          %368 = dma.done [#allocation7], 1024
        $region60: #{tpu_custom_call.1} parent=47 // pred_fallthru
          _
        %s369 = smul.u32 4, %s26
        %p370 = scmp.lt.s32.totalorder %s369, 3
        %s371 = scalar_select %p370, %s369, 3
        %s372 = smul.addr %s371, 8
        %s373 = scalar_lea.vmem %s0, %s372
        %p374 = pneg %p61
        %p375 = pneg %p58
        %p376 = pneg %p87
        %p377 = pneg %p84
        %p378 = pneg %p113
        %p379 = pneg %p110
        %s380 = smul.u32 2, %s28
        %p381 = scmp.lt.s32.totalorder %s380, 1
        %s382 = scalar_select %p381, %s380, 1
        %s383 = smul.addr %s382, 4
        %s384 = scalar_lea.vmem %s3, %s383
        %p385 = pneg %p139
        %p386 = pneg %p136
        %p387 = pneg %p165
        %p388 = pneg %p162
        %s389 = smul.u32 2, %s28
        %p390 = scmp.lt.s32.totalorder %s389, 1
        %s391 = scalar_select %p390, %s389, 1
        %s392 = scalar_lea.vmem %s5, %s391
        %p393 = pneg %p191
        %p394 = pneg %p188
        %s395 = smul.u32 2, %s28
        %p396 = scmp.lt.s32.totalorder %s395, 1
        %s397 = scalar_select %p396, %s395, 1
        %s398 = scalar_lea.vmem %s6, %s397
        %p399 = pneg %p217
        %p400 = pneg %p214
        %p401 = pneg %p243
        %p402 = pneg %p240
        %s403 = smul.u32 4, %s26
        %p404 = scmp.lt.s32.totalorder %s403, 3
        %s405 = scalar_select %p404, %s403, 3
        %s406 = smul.addr %s405, 8
        %s407 = scalar_lea.vmem %s0, %s406
        %s408 = smul.u32 4, %s26
        %s409 = smul.u32 4, %s26
        %s410 = smul.u32 4, %s26
        %s411 = smul.u32 2, %s28
        %p412 = scmp.lt.s32.totalorder %s411, 1
        %s413 = scalar_select %p412, %s411, 1
        %s414 = smul.addr %s413, 4
        %s415 = scalar_lea.vmem %s3, %s414
        %s416 = smul.u32 2, %s28
        %s417 = smul.u32 2, %s28
        %s418 = smul.u32 2, %s28
        %p419 = scmp.lt.s32.totalorder %s418, 1
        %s420 = scalar_select %p419, %s418, 1
        %s421 = scalar_lea.vmem %s5, %s420
        %s422 = smul.u32 2, %s28
        %s423 = smul.u32 2, %s28
        %p424 = scmp.lt.s32.totalorder %s423, 1
        %s425 = scalar_select %p424, %s423, 1
        %s426 = scalar_lea.vmem %s6, %s425
        %s427 = smul.u32 2, %s28
        %v429 = vld [vmem:[#allocation3] sm:$0xf]
        %v430 = vld [vmem:[#allocation3 + $0x4] sm:$0xf]
        %v431 = vld [vmem:[#allocation3 + $0x8] sm:$0xf]
        %v432 = vld [vmem:[#allocation3 + $0xc] sm:$0xf]
        %v433 = vld [vmem:[%s415] sm:$0xff]
        %v434 = vld [vmem:[%s415 + $0x8] sm:$0xff]
        %v435 = vld [vmem:[%s415 + $0x10] sm:$0xff]
        %v436 = vld [vmem:[%s415 + $0x18] sm:$0xff]
        %v437 = vld [vmem:[%s421] sm:$0x3]
        %v439 = vperm.slane %v437, 0
        %v440 = vperm.slane %v437, 1
        %v447 = vunpack.c.l.b16 %v429
        %v448 = vunpack.c.l.b16 %v430
        %v449 = vunpack.c.l.b16 %v431
        %v450 = vunpack.c.l.b16 %v432
        %v451 = vpack.c.b16 %v448, %v447
        %v452 = vpack.c.b16 %v450, %v449
        %v457 = vunpack.c.l.b16 %v433
        %v458 = vunpack.c.h.b16 %v433
        %v459 = vunpack.c.l.b16 %v434
        %v460 = vunpack.c.h.b16 %v434
        %v461 = vunpack.c.l.b16 %v435
        %v462 = vunpack.c.h.b16 %v435
        %v463 = vunpack.c.l.b16 %v436
        %v464 = vunpack.c.h.b16 %v436
        %v465 = vpack.c.b16 %v459, %v457
        %v466 = vpack.c.b16 %v460, %v458
        %v467 = vpack.c.b16 %v463, %v461
        %v468 = vpack.c.b16 %v464, %v462
        %vm473 = vcmask 261120
        %v475 = vsel %vm473, %v451, 0
        %v478 = vsel %vm473, %v452, 0
        %480 = vmatpush.bf16.msra.mxu0 0
        %481 = vmatpush.bf16.msra.mxu0 0
        %482 = vmatpush.bf16.msra.mxu0 0
        %483 = vmatpush.bf16.msra.mxu0 0
        %484 = vmatpush.bf16.msra.mxu0 0
        %485 = vmatpush.bf16.msra.mxu0 0
        %486 = vmatpush.bf16.msra.mxu0 %v467
        %487 = vmatpush.bf16.msra.mxu0 %v465
        %488 = vmatmul.bf16.gmra.mxu0 %v475
        %v489 = vpop.f32.mrf.mxu0
        %v490 = vadd.f32 %v439, %v489
        %v491 = vpop.f32.mrf.mxu0
        %v492 = vadd.f32 %v439, %v491
        %493 = vmatmul.bf16.gmra.mxu0 %v478
        %v494 = vpop.f32.mrf.mxu0
        %v495 = vadd.f32 %v439, %v494
        %v496 = vpop.f32.mrf.mxu0
        %v497 = vadd.f32 %v439, %v496
        %498 = vdwg.mxu0
        %499 = vmatpush.bf16.msra.mxu0 0
        %500 = vmatpush.bf16.msra.mxu0 0
        %501 = vmatpush.bf16.msra.mxu0 0
        %502 = vmatpush.bf16.msra.mxu0 0
        %503 = vmatpush.bf16.msra.mxu0 0
        %504 = vmatpush.bf16.msra.mxu0 0
        %505 = vmatpush.bf16.msra.mxu0 %v468
        %506 = vmatpush.bf16.msra.mxu0 %v466
        %507 = vmatmul.bf16.gmra.mxu0 %v475
        %v508 = vpop.f32.mrf.mxu0
        %v509 = vadd.f32 %v440, %v508
        %v510 = vpop.f32.mrf.mxu0
        %v511 = vadd.f32 %v440, %v510
        %512 = vmatmul.bf16.gmra.mxu0 %v478
        %v513 = vpop.f32.mrf.mxu0
        %v514 = vadd.f32 %v440, %v513
        %v515 = vpop.f32.mrf.mxu0
        %v516 = vadd.f32 %v440, %v515
        %517 = vdwg.mxu0
        %v518 = vld [vmem:[#allocation6] sm:$0xf]
        %v519 = vld [vmem:[#allocation6 + $0x4] sm:$0xf]
        %v520 = vld [vmem:[#allocation6 + $0x8] sm:$0xf]
        %v521 = vld [vmem:[#allocation6 + $0xc] sm:$0xf]
        %v522 = vld [vmem:[#allocation8] sm:$0xff]
        %v523 = vld [vmem:[#allocation8 + $0x8] sm:$0xff]
        %v524 = vld [vmem:[#allocation8 + $0x10] sm:$0xff]
        %v525 = vld [vmem:[#allocation8 + $0x18] sm:$0xff]
        %v526 = vld [vmem:[#allocation8 + $0x20] sm:$0xff]
        %v527 = vld [vmem:[#allocation8 + $0x28] sm:$0xff]
        %v528 = vld [vmem:[#allocation8 + $0x30] sm:$0xff]
        %v529 = vld [vmem:[#allocation8 + $0x38] sm:$0xff]
        %v530 = vld [vmem:[%s426] sm:$0x3]
        %v532 = vperm.slane %v530, 0
        %v533 = vperm.slane %v530, 1
        %v540 = vunpack.c.l.b16 %v518
        %v541 = vunpack.c.l.b16 %v519
        %v542 = vunpack.c.l.b16 %v520
        %v543 = vunpack.c.l.b16 %v521
        %v544 = vpack.c.b16 %v541, %v540
        %v545 = vpack.c.b16 %v543, %v542
        %v554 = vunpack.c.l.b16 %v522
        %v555 = vunpack.c.h.b16 %v522
        %v556 = vunpack.c.l.b16 %v523
        %v557 = vunpack.c.h.b16 %v523
        %v558 = vunpack.c.l.b16 %v524
        %v559 = vunpack.c.h.b16 %v524
        %v560 = vunpack.c.l.b16 %v525
        %v561 = vunpack.c.h.b16 %v525
        %v562 = vunpack.c.l.b16 %v526
        %v563 = vunpack.c.h.b16 %v526
        %v564 = vunpack.c.l.b16 %v527
        %v565 = vunpack.c.h.b16 %v527
        %v566 = vunpack.c.l.b16 %v528
        %v567 = vunpack.c.h.b16 %v528
        %v568 = vunpack.c.l.b16 %v529
        %v569 = vunpack.c.h.b16 %v529
        %v570 = vpack.c.b16 %v556, %v554
        %v571 = vpack.c.b16 %v557, %v555
        %v572 = vpack.c.b16 %v560, %v558
        %v573 = vpack.c.b16 %v561, %v559
        %v574 = vpack.c.b16 %v564, %v562
        %v575 = vpack.c.b16 %v565, %v563
        %v576 = vpack.c.b16 %v568, %v566
        %v577 = vpack.c.b16 %v569, %v567
        %vm586 = vcmask 523264
        %v588 = vsel %vm586, %v544, 0
        %v591 = vsel %vm586, %v545, 0
        %593 = vmatpush.bf16.msra.mxu0 0
        %594 = vmatpush.bf16.msra.mxu0 0
        %595 = vmatpush.bf16.msra.mxu0 0
        %596 = vmatpush.bf16.msra.mxu0 0
        %597 = vmatpush.bf16.msra.mxu0 %v576
        %598 = vmatpush.bf16.msra.mxu0 %v574
        %599 = vmatpush.bf16.msra.mxu0 %v572
        %600 = vmatpush.bf16.msra.mxu0 %v570
        %601 = vmatmul.bf16.gmra.mxu0 %v588
        %v602 = vpop.f32.mrf.mxu0
        %v603 = vadd.f32 %v532, %v602
        %v604 = vpop.f32.mrf.mxu0
        %v605 = vadd.f32 %v532, %v604
        %606 = vmatmul.bf16.gmra.mxu0 %v591
        %v607 = vpop.f32.mrf.mxu0
        %v608 = vadd.f32 %v532, %v607
        %v609 = vpop.f32.mrf.mxu0
        %v610 = vadd.f32 %v532, %v609
        %611 = vdwg.mxu0
        %612 = vmatpush.bf16.msra.mxu0 0
        %613 = vmatpush.bf16.msra.mxu0 0
        %614 = vmatpush.bf16.msra.mxu0 0
        %615 = vmatpush.bf16.msra.mxu0 0
        %616 = vmatpush.bf16.msra.mxu0 %v577
        %617 = vmatpush.bf16.msra.mxu0 %v575
        %618 = vmatpush.bf16.msra.mxu0 %v573
        %619 = vmatpush.bf16.msra.mxu0 %v571
        %620 = vmatmul.bf16.gmra.mxu0 %v588
        %v621 = vpop.f32.mrf.mxu0
        %v622 = vadd.f32 %v533, %v621
        %v623 = vpop.f32.mrf.mxu0
        %v624 = vadd.f32 %v533, %v623
        %625 = vmatmul.bf16.gmra.mxu0 %v591
        %v626 = vpop.f32.mrf.mxu0
        %v627 = vadd.f32 %v533, %v626
        %v628 = vpop.f32.mrf.mxu0
        %v629 = vadd.f32 %v533, %v628
        %630 = vdwg.mxu0
        %v631 = vlaneseq
        %v632 = vand.u32 %v631, 127
        %v633 = vadd.s32 %v632, 128
        %s634 = smul.u32 %s28, 256
        %v635 = vstv %s634
        %v636 = vadd.s32 %v632, %v635
        %v637 = vadd.s32 %v633, %v635
        %p638 = scmp.eq.s32.totalorder %s27, 0
        %p639 = scmp.eq.s32.totalorder %s28, 0
        %p640 = pnand %p638, %p639
        %p641 = pneg %p640
        // Predicated region
        $region61: #{tpu_custom_call.1} parent=47 // pred_check
          _
        $region62: #{tpu_custom_call.1} parent=47 // pred_check_branch
          %643 = sbr.rel (%p640) target = $region64
        $region63: #{tpu_custom_call.1} parent=47 // pred_region
          %vm644 = vcmp.lt.s32.totalorder %v632, 2
          %v645 = vsel %vm644, -1e+30, 0.0
          %vm646 = vcmask 64512
          %647 = vst.msk [vmem:[#allocation2] sm:$0xff] %vm646, %v645
          %648 = vst.msk [vmem:[#allocation2 + $0x8] sm:$0xff] %vm646, %v645
          %649 = vst.msk [vmem:[#allocation2 + $0x10] sm:$0xff] %vm646, %v645
          %650 = vst.msk [vmem:[#allocation2 + $0x18] sm:$0xff] %vm646, %v645
        $region64: #{tpu_custom_call.1} parent=47 // pred_fallthru
          _
        // Predicated region
        $region65: #{tpu_custom_call.1} parent=47 // pred_check
          %p651 = pneg %p638
        $region66: #{tpu_custom_call.1} parent=47 // pred_check_branch
          %653 = sbr.rel (%p651) target = $region68
        $region67: #{tpu_custom_call.1} parent=47 // pred_region
          %v654 = vld [vmem:[#allocation2] sm:$0xff]
          %v655 = vld [vmem:[#allocation2 + $0x8] sm:$0xff]
          %v656 = vld [vmem:[#allocation2 + $0x10] sm:$0xff]
          %v657 = vld [vmem:[#allocation2 + $0x18] sm:$0xff]
          %v658 = vmax.f32 %v490, %v509
          %659 = vmax.xlane.f32.xlu0 %v658
          %v660 = vpop.xlane.xlu0 %659
          %v661 = vmax.f32 %v492, %v511
          %662 = vmax.xlane.f32.xlu0 %v661
          %v663 = vpop.xlane.xlu0 %662
          %v664 = vmax.f32 %v495, %v514
          %665 = vmax.xlane.f32.xlu0 %v664
          %v666 = vpop.xlane.xlu0 %665
          %v667 = vmax.f32 %v497, %v516
          %668 = vmax.xlane.f32.xlu0 %v667
          %v669 = vpop.xlane.xlu0 %668
          %v670 = vmax.f32 %v654, %v660
          %v671 = vmax.f32 %v655, %v663
          %v672 = vmax.f32 %v656, %v666
          %v673 = vmax.f32 %v657, %v669
          %v674 = vmax.f32 %v603, %v622
          %675 = vmax.xlane.f32.xlu0 %v674
          %v676 = vpop.xlane.xlu0 %675
          %v677 = vmax.f32 %v605, %v624
          %678 = vmax.xlane.f32.xlu0 %v677
          %v679 = vpop.xlane.xlu0 %678
          %v680 = vmax.f32 %v608, %v627
          %681 = vmax.xlane.f32.xlu0 %v680
          %v682 = vpop.xlane.xlu0 %681
          %v683 = vmax.f32 %v610, %v629
          %684 = vmax.xlane.f32.xlu0 %v683
          %v685 = vpop.xlane.xlu0 %684
          %v686 = vmax.f32 %v654, %v676
          %v687 = vmax.f32 %v655, %v679
          %v688 = vmax.f32 %v656, %v682
          %v689 = vmax.f32 %v657, %v685
          %v690 = vsub.f32 %v654, %v670
          %v691 = vsub.f32 %v655, %v671
          %v692 = vsub.f32 %v656, %v672
          %v693 = vsub.f32 %v657, %v673
          %v694 = vmul.f32 %v690, 1.442695
          %v695 = vpow.pop %v694
          %v696 = vmul.f32 %v691, 1.442695
          %v697 = vpow.pop %v696
          %v698 = vmul.f32 %v692, 1.442695
          %v699 = vpow.pop %v698
          %v700 = vmul.f32 %v693, 1.442695
          %v701 = vpow.pop %v700
          %706 = vrot.lane.b32.xlu0 %v695, 2
          %v707 = vpop.permute.xlu0 %706
          %708 = vrot.lane.b32.xlu0 %v697, 2
          %v709 = vpop.permute.xlu0 %708
          %710 = vrot.lane.b32.xlu0 %v699, 2
          %v711 = vpop.permute.xlu0 %710
          %712 = vrot.lane.b32.xlu0 %v701, 2
          %v713 = vpop.permute.xlu0 %712
          %v718 = vmul.f32 %v654, %v707
          %v719 = vmul.f32 %v655, %v709
          %v720 = vmul.f32 %v656, %v711
          %v721 = vmul.f32 %v657, %v713
          %723 = vset.pattern.permute.xlu0 0
          %724 = vperm.xlu0 %723, %v670
          %v725 = vpop.permute.xlu0 %724
          %728 = vset.pattern.permute.xlu0 0
          %729 = vperm.xlu0 %728, %v671
          %v730 = vpop.permute.xlu0 %729
          %733 = vset.pattern.permute.xlu0 0
          %734 = vperm.xlu0 %733, %v672
          %v735 = vpop.permute.xlu0 %734
          %738 = vset.pattern.permute.xlu0 0
          %739 = vperm.xlu0 %738, %v673
          %v740 = vpop.permute.xlu0 %739
          %v742 = vsub.f32 %v490, %v725
          %v743 = vsub.f32 %v509, %v725
          %v744 = vsub.f32 %v492, %v730
          %v745 = vsub.f32 %v511, %v730
          %v746 = vsub.f32 %v495, %v735
          %v747 = vsub.f32 %v514, %v735
          %v748 = vsub.f32 %v497, %v740
          %v749 = vsub.f32 %v516, %v740
          %v750 = vmul.f32 %v742, 1.442695
          %v751 = vpow.pop %v750
          %v752 = vmul.f32 %v743, 1.442695
          %v753 = vpow.pop %v752
          %v754 = vmul.f32 %v744, 1.442695
          %v755 = vpow.pop %v754
          %v756 = vmul.f32 %v745, 1.442695
          %v757 = vpow.pop %v756
          %v758 = vmul.f32 %v746, 1.442695
          %v759 = vpow.pop %v758
          %v760 = vmul.f32 %v747, 1.442695
          %v761 = vpow.pop %v760
          %v762 = vmul.f32 %v748, 1.442695
          %v763 = vpow.pop %v762
          %v764 = vmul.f32 %v749, 1.442695
          %v765 = vpow.pop %v764
          %v766 = vadd.f32 %v751, %v753
          %767 = vadd.xlane.f32.xlu0 %v766
          %v768 = vpop.xlane.xlu0 %767
          %v769 = vadd.f32 %v755, %v757
          %770 = vadd.xlane.f32.xlu0 %v769
          %v771 = vpop.xlane.xlu0 %770
          %v772 = vadd.f32 %v759, %v761
          %773 = vadd.xlane.f32.xlu0 %v772
          %v774 = vpop.xlane.xlu0 %773
          %v775 = vadd.f32 %v763, %v765
          %776 = vadd.xlane.f32.xlu0 %v775
          %v777 = vpop.xlane.xlu0 %776
          %v778 = vadd.f32 %v718, %v768
          %v779 = vadd.f32 %v719, %v771
          %v780 = vadd.f32 %v720, %v774
          %v781 = vadd.f32 %v721, %v777
          %vm782 = vcmask 23568
          %783 = vst.msk [vmem:[#allocation2] sm:$0xff] %vm782, %v778
          %784 = vst.msk [vmem:[#allocation2 + $0x8] sm:$0xff] %vm782, %v779
          %785 = vst.msk [vmem:[#allocation2 + $0x10] sm:$0xff] %vm782, %v780
          %786 = vst.msk [vmem:[#allocation2 + $0x18] sm:$0xff] %vm782, %v781
          %v787 = vld [vmem:[#allocation2] sm:$0xff]
          %v788 = vld [vmem:[#allocation2 + $0x8] sm:$0xff]
          %v789 = vld [vmem:[#allocation2 + $0x10] sm:$0xff]
          %v790 = vld [vmem:[#allocation2 + $0x18] sm:$0xff]
          %v791 = vsub.f32 %v654, %v686
          %v792 = vsub.f32 %v655, %v687
          %v793 = vsub.f32 %v656, %v688
          %v794 = vsub.f32 %v657, %v689
          %v795 = vmul.f32 %v791, 1.442695
          %v796 = vpow.pop %v795
          %v797 = vmul.f32 %v792, 1.442695
          %v798 = vpow.pop %v797
          %v799 = vmul.f32 %v793, 1.442695
          %v800 = vpow.pop %v799
          %v801 = vmul.f32 %v794, 1.442695
          %v802 = vpow.pop %v801
          %807 = vrot.lane.b32.xlu0 %v796, 2
          %v808 = vpop.permute.xlu0 %807
          %809 = vrot.lane.b32.xlu0 %v798, 2
          %v810 = vpop.permute.xlu0 %809
          %811 = vrot.lane.b32.xlu0 %v800, 2
          %v812 = vpop.permute.xlu0 %811
          %813 = vrot.lane.b32.xlu0 %v802, 2
          %v814 = vpop.permute.xlu0 %813
          %v819 = vmul.f32 %v787, %v808
          %v820 = vmul.f32 %v788, %v810
          %v821 = vmul.f32 %v789, %v812
          %v822 = vmul.f32 %v790, %v814
          %824 = vset.pattern.permute.xlu0 1
          %825 = vperm.xlu0 %824, %v686
          %v826 = vpop.permute.xlu0 %825
          %829 = vset.pattern.permute.xlu0 1
          %830 = vperm.xlu0 %829, %v687
          %v831 = vpop.permute.xlu0 %830
          %834 = vset.pattern.permute.xlu0 1
          %835 = vperm.xlu0 %834, %v688
          %v836 = vpop.permute.xlu0 %835
          %839 = vset.pattern.permute.xlu0 1
          %840 = vperm.xlu0 %839, %v689
          %v841 = vpop.permute.xlu0 %840
          %v843 = vsub.f32 %v603, %v826
          %v844 = vsub.f32 %v622, %v826
          %v845 = vsub.f32 %v605, %v831
          %v846 = vsub.f32 %v624, %v831
          %v847 = vsub.f32 %v608, %v836
          %v848 = vsub.f32 %v627, %v836
          %v849 = vsub.f32 %v610, %v841
          %v850 = vsub.f32 %v629, %v841
          %v851 = vmul.f32 %v843, 1.442695
          %v852 = vpow.pop %v851
          %v853 = vmul.f32 %v844, 1.442695
          %v854 = vpow.pop %v853
          %v855 = vmul.f32 %v845, 1.442695
          %v856 = vpow.pop %v855
          %v857 = vmul.f32 %v846, 1.442695
          %v858 = vpow.pop %v857
          %v859 = vmul.f32 %v847, 1.442695
          %v860 = vpow.pop %v859
          %v861 = vmul.f32 %v848, 1.442695
          %v862 = vpow.pop %v861
          %v863 = vmul.f32 %v849, 1.442695
          %v864 = vpow.pop %v863
          %v865 = vmul.f32 %v850, 1.442695
          %v866 = vpow.pop %v865
          %v867 = vadd.f32 %v852, %v854
          %868 = vadd.xlane.f32.xlu0 %v867
          %v869 = vpop.xlane.xlu0 %868
          %v870 = vadd.f32 %v856, %v858
          %871 = vadd.xlane.f32.xlu0 %v870
          %v872 = vpop.xlane.xlu0 %871
          %v873 = vadd.f32 %v860, %v862
          %874 = vadd.xlane.f32.xlu0 %v873
          %v875 = vpop.xlane.xlu0 %874
          %v876 = vadd.f32 %v864, %v866
          %877 = vadd.xlane.f32.xlu0 %v876
          %v878 = vpop.xlane.xlu0 %877
          %v879 = vadd.f32 %v819, %v869
          %v880 = vadd.f32 %v820, %v872
          %v881 = vadd.f32 %v821, %v875
          %v882 = vadd.f32 %v822, %v878
          %vm883 = vcmask 31768
          %884 = vst.msk [vmem:[#allocation2] sm:$0xff] %vm883, %v879
          %885 = vst.msk [vmem:[#allocation2 + $0x8] sm:$0xff] %vm883, %v880
          %886 = vst.msk [vmem:[#allocation2 + $0x10] sm:$0xff] %vm883, %v881
          %887 = vst.msk [vmem:[#allocation2 + $0x18] sm:$0xff] %vm883, %v882
          %vm888 = vcmask 7168
          %889 = vst.msk [vmem:[#allocation2] sm:$0xff] %vm888, %v670
          %890 = vst.msk [vmem:[#allocation2 + $0x8] sm:$0xff] %vm888, %v671
          %891 = vst.msk [vmem:[#allocation2 + $0x10] sm:$0xff] %vm888, %v672
          %892 = vst.msk [vmem:[#allocation2 + $0x18] sm:$0xff] %vm888, %v673
          %vm893 = vcmask 15368
          %894 = vst.msk [vmem:[#allocation2] sm:$0xff] %vm893, %v686
          %895 = vst.msk [vmem:[#allocation2 + $0x8] sm:$0xff] %vm893, %v687
          %896 = vst.msk [vmem:[#allocation2 + $0x10] sm:$0xff] %vm893, %v688
          %897 = vst.msk [vmem:[#allocation2 + $0x18] sm:$0xff] %vm893, %v689
          %v898 = vld [vmem:[%s407] sm:$0xff]
          %v899 = vld [vmem:[%s407 + $0x8] sm:$0xff]
          %v900 = vld [vmem:[%s407 + $0x10] sm:$0xff]
          %v901 = vld [vmem:[%s407 + $0x18] sm:$0xff]
          %902 = vset.pattern.permute.xlu0 0
          %903 = vperm.xlu0 %902, %v898
          %v904 = vpop.permute.xlu0 %903
          %905 = vset.pattern.permute.xlu0 0
          %906 = vperm.xlu0 %905, %v899
          %v907 = vpop.permute.xlu0 %906
          %908 = vset.pattern.permute.xlu0 0
          %909 = vperm.xlu0 %908, %v900
          %v910 = vpop.permute.xlu0 %909
          %911 = vset.pattern.permute.xlu0 0
          %912 = vperm.xlu0 %911, %v901
          %v913 = vpop.permute.xlu0 %912
          %vm914 = vcmp.eq.s32.totalorder %v636, %v904
          %vm915 = vcmp.eq.s32.totalorder %v637, %v904
          %vm916 = vcmp.eq.s32.totalorder %v636, %v907
          %vm917 = vcmp.eq.s32.totalorder %v637, %v907
          %vm918 = vcmp.eq.s32.totalorder %v636, %v910
          %vm919 = vcmp.eq.s32.totalorder %v637, %v910
          %vm920 = vcmp.eq.s32.totalorder %v636, %v913
          %vm921 = vcmp.eq.s32.totalorder %v637, %v913
          %v922 = vld [vmem:[#allocation2] sm:$0xff]
          %v923 = vld [vmem:[#allocation2 + $0x8] sm:$0xff]
          %v924 = vld [vmem:[#allocation2 + $0x10] sm:$0xff]
          %v925 = vld [vmem:[#allocation2 + $0x18] sm:$0xff]
          %v926 = vsel %vm914, %v490, 0.0
          %v927 = vsel %vm915, %v509, 0.0
          %v928 = vsel %vm916, %v492, 0.0
          %v929 = vsel %vm917, %v511, 0.0
          %v930 = vsel %vm918, %v495, 0.0
          %v931 = vsel %vm919, %v514, 0.0
          %v932 = vsel %vm920, %v497, 0.0
          %v933 = vsel %vm921, %v516, 0.0
          %v934 = vadd.f32 %v926, %v927
          %935 = vadd.xlane.f32.xlu0 %v934
          %v936 = vpop.xlane.xlu0 %935
          %v937 = vadd.f32 %v928, %v929
          %938 = vadd.xlane.f32.xlu0 %v937
          %v939 = vpop.xlane.xlu0 %938
          %v940 = vadd.f32 %v930, %v931
          %941 = vadd.xlane.f32.xlu0 %v940
          %v942 = vpop.xlane.xlu0 %941
          %v943 = vadd.f32 %v932, %v933
          %944 = vadd.xlane.f32.xlu0 %v943
          %v945 = vpop.xlane.xlu0 %944
          %v946 = vadd.f32 %v922, %v936
          %v947 = vadd.f32 %v923, %v939
          %v948 = vadd.f32 %v924, %v942
          %v949 = vadd.f32 %v925, %v945
          %vm950 = vcmask 39968
          %951 = vst.msk [vmem:[#allocation2] sm:$0xff] %vm950, %v946
          %952 = vst.msk [vmem:[#allocation2 + $0x8] sm:$0xff] %vm950, %v947
          %953 = vst.msk [vmem:[#allocation2 + $0x10] sm:$0xff] %vm950, %v948
          %954 = vst.msk [vmem:[#allocation2 + $0x18] sm:$0xff] %vm950, %v949
        $region68: #{tpu_custom_call.1} parent=47 // pred_fallthru
          _
        %p955 = scmp.eq.s32.totalorder %s27, 1
        // Predicated region
        $region69: #{tpu_custom_call.1} parent=47 // pred_check
          %p956 = pneg %p955
        $region70: #{tpu_custom_call.1} parent=47 // pred_check_branch
          %958 = sbr.rel (%p956) target = $region72
        $region71: #{tpu_custom_call.1} parent=47 // pred_region
          %v959 = vld [vmem:[#allocation2] sm:$0xff]
          %v960 = vld [vmem:[#allocation2 + $0x8] sm:$0xff]
          %v961 = vld [vmem:[#allocation2 + $0x10] sm:$0xff]
          %v962 = vld [vmem:[#allocation2 + $0x18] sm:$0xff]
          %v963 = vlog2.pop %v959
          %v964 = vmul.f32 %v963, 0.6931472
          %v965 = vlog2.pop %v960
          %v966 = vmul.f32 %v965, 0.6931472
          %v967 = vlog2.pop %v961
          %v968 = vmul.f32 %v967, 0.6931472
          %v969 = vlog2.pop %v962
          %v970 = vmul.f32 %v969, 0.6931472
          %975 = vrot.lane.b32.xlu0 %v964, 126
          %v976 = vpop.permute.xlu0 %975
          %977 = vrot.lane.b32.xlu0 %v966, 126
          %v978 = vpop.permute.xlu0 %977
          %979 = vrot.lane.b32.xlu0 %v968, 126
          %v980 = vpop.permute.xlu0 %979
          %981 = vrot.lane.b32.xlu0 %v970, 126
          %v982 = vpop.permute.xlu0 %981
          %v987 = vadd.f32 %v959, %v976
          %v988 = vadd.f32 %v960, %v978
          %v989 = vadd.f32 %v961, %v980
          %v990 = vadd.f32 %v962, %v982
          %992 = vset.pattern.permute.xlu0 0
          %993 = vperm.xlu0 %992, %v987
          %v994 = vpop.permute.xlu0 %993
          %997 = vset.pattern.permute.xlu0 0
          %998 = vperm.xlu0 %997, %v988
          %v999 = vpop.permute.xlu0 %998
          %1002 = vset.pattern.permute.xlu0 0
          %1003 = vperm.xlu0 %1002, %v989
          %v1004 = vpop.permute.xlu0 %1003
          %1007 = vset.pattern.permute.xlu0 0
          %1008 = vperm.xlu0 %1007, %v990
          %v1009 = vpop.permute.xlu0 %1008
          %v1011 = vsub.f32 %v490, %v994
          %v1012 = vsub.f32 %v509, %v994
          %v1013 = vsub.f32 %v492, %v999
          %v1014 = vsub.f32 %v511, %v999
          %v1015 = vsub.f32 %v495, %v1004
          %v1016 = vsub.f32 %v514, %v1004
          %v1017 = vsub.f32 %v497, %v1009
          %v1018 = vsub.f32 %v516, %v1009
          %1019 = vset.pattern.permute.xlu0 1
          %1020 = vperm.xlu0 %1019, %v987
          %v1021 = vpop.permute.xlu0 %1020
          %1023 = vset.pattern.permute.xlu0 1
          %1024 = vperm.xlu0 %1023, %v988
          %v1025 = vpop.permute.xlu0 %1024
          %1027 = vset.pattern.permute.xlu0 1
          %1028 = vperm.xlu0 %1027, %v989
          %v1029 = vpop.permute.xlu0 %1028
          %1031 = vset.pattern.permute.xlu0 1
          %1032 = vperm.xlu0 %1031, %v990
          %v1033 = vpop.permute.xlu0 %1032
          %v1035 = vsub.f32 %v603, %v1021
          %v1036 = vsub.f32 %v622, %v1021
          %v1037 = vsub.f32 %v605, %v1025
          %v1038 = vsub.f32 %v624, %v1025
          %v1039 = vsub.f32 %v608, %v1029
          %v1040 = vsub.f32 %v627, %v1029
          %v1041 = vsub.f32 %v610, %v1033
          %v1042 = vsub.f32 %v629, %v1033
          %v1043 = vmul.f32 %v1011, 1.442695
          %v1044 = vpow.pop %v1043
          %v1045 = vmul.f32 %v1012, 1.442695
          %v1046 = vpow.pop %v1045
          %v1047 = vmul.f32 %v1013, 1.442695
          %v1048 = vpow.pop %v1047
          %v1049 = vmul.f32 %v1014, 1.442695
          %v1050 = vpow.pop %v1049
          %v1051 = vmul.f32 %v1015, 1.442695
          %v1052 = vpow.pop %v1051
          %v1053 = vmul.f32 %v1016, 1.442695
          %v1054 = vpow.pop %v1053
          %v1055 = vmul.f32 %v1017, 1.442695
          %v1056 = vpow.pop %v1055
          %v1057 = vmul.f32 %v1018, 1.442695
          %v1058 = vpow.pop %v1057
          %v1059 = vmul.f32 %v1035, 1.442695
          %v1060 = vpow.pop %v1059
          %v1061 = vmul.f32 %v1036, 1.442695
          %v1062 = vpow.pop %v1061
          %v1063 = vmul.f32 %v1037, 1.442695
          %v1064 = vpow.pop %v1063
          %v1065 = vmul.f32 %v1038, 1.442695
          %v1066 = vpow.pop %v1065
          %v1067 = vmul.f32 %v1039, 1.442695
          %v1068 = vpow.pop %v1067
          %v1069 = vmul.f32 %v1040, 1.442695
          %v1070 = vpow.pop %v1069
          %v1071 = vmul.f32 %v1041, 1.442695
          %v1072 = vpow.pop %v1071
          %v1073 = vmul.f32 %v1042, 1.442695
          %v1074 = vpow.pop %v1073
          %v1075 = vmul.f32 %v1044, 0.5
          %v1076 = vmul.f32 %v1046, 0.5
          %v1077 = vmul.f32 %v1048, 0.5
          %v1078 = vmul.f32 %v1050, 0.5
          %v1079 = vmul.f32 %v1052, 0.5
          %v1080 = vmul.f32 %v1054, 0.5
          %v1081 = vmul.f32 %v1056, 0.5
          %v1082 = vmul.f32 %v1058, 0.5
          %v1083 = vmul.f32 %v1060, 0.5
          %v1084 = vmul.f32 %v1062, 0.5
          %v1085 = vmul.f32 %v1064, 0.5
          %v1086 = vmul.f32 %v1066, 0.5
          %v1087 = vmul.f32 %v1068, 0.5
          %v1088 = vmul.f32 %v1070, 0.5
          %v1089 = vmul.f32 %v1072, 0.5
          %v1090 = vmul.f32 %v1074, 0.5
          %v1091 = vadd.f32 %v1075, %v1083
          %v1092 = vadd.f32 %v1076, %v1084
          %v1093 = vadd.f32 %v1077, %v1085
          %v1094 = vadd.f32 %v1078, %v1086
          %v1095 = vadd.f32 %v1079, %v1087
          %v1096 = vadd.f32 %v1080, %v1088
          %v1097 = vadd.f32 %v1081, %v1089
          %v1098 = vadd.f32 %v1082, %v1090
          %v1099 = vlog2.pop %v1091
          %v1100 = vmul.f32 %v1099, 0.6931472
          %v1101 = vlog2.pop %v1092
          %v1102 = vmul.f32 %v1101, 0.6931472
          %v1103 = vlog2.pop %v1093
          %v1104 = vmul.f32 %v1103, 0.6931472
          %v1105 = vlog2.pop %v1094
          %v1106 = vmul.f32 %v1105, 0.6931472
          %v1107 = vlog2.pop %v1095
          %v1108 = vmul.f32 %v1107, 0.6931472
          %v1109 = vlog2.pop %v1096
          %v1110 = vmul.f32 %v1109, 0.6931472
          %v1111 = vlog2.pop %v1097
          %v1112 = vmul.f32 %v1111, 0.6931472
          %v1113 = vlog2.pop %v1098
          %v1114 = vmul.f32 %v1113, 0.6931472
          %v1115 = vsub.f32 %v1035, %v1100
          %v1116 = vsub.f32 %v1036, %v1102
          %v1117 = vsub.f32 %v1037, %v1104
          %v1118 = vsub.f32 %v1038, %v1106
          %v1119 = vsub.f32 %v1039, %v1108
          %v1120 = vsub.f32 %v1040, %v1110
          %v1121 = vsub.f32 %v1041, %v1112
          %v1122 = vsub.f32 %v1042, %v1114
          %v1123 = vmul.f32 %v1060, %v1115
          %v1124 = vmul.f32 %v1062, %v1116
          %v1125 = vmul.f32 %v1064, %v1117
          %v1126 = vmul.f32 %v1066, %v1118
          %v1127 = vmul.f32 %v1068, %v1119
          %v1128 = vmul.f32 %v1070, %v1120
          %v1129 = vmul.f32 %v1072, %v1121
          %v1130 = vmul.f32 %v1074, %v1122
          %v1131 = vmul.f32 %v1123, 0.5
          %v1132 = vmul.f32 %v1124, 0.5
          %v1133 = vmul.f32 %v1125, 0.5
          %v1134 = vmul.f32 %v1126, 0.5
          %v1135 = vmul.f32 %v1127, 0.5
          %v1136 = vmul.f32 %v1128, 0.5
          %v1137 = vmul.f32 %v1129, 0.5
          %v1138 = vmul.f32 %v1130, 0.5
          %v1139 = vsub.f32 %v1011, %v1100
          %v1140 = vsub.f32 %v1012, %v1102
          %v1141 = vsub.f32 %v1013, %v1104
          %v1142 = vsub.f32 %v1014, %v1106
          %v1143 = vsub.f32 %v1015, %v1108
          %v1144 = vsub.f32 %v1016, %v1110
          %v1145 = vsub.f32 %v1017, %v1112
          %v1146 = vsub.f32 %v1018, %v1114
          %v1147 = vmul.f32 %v1044, %v1139
          %v1148 = vmul.f32 %v1046, %v1140
          %v1149 = vmul.f32 %v1048, %v1141
          %v1150 = vmul.f32 %v1050, %v1142
          %v1151 = vmul.f32 %v1052, %v1143
          %v1152 = vmul.f32 %v1054, %v1144
          %v1153 = vmul.f32 %v1056, %v1145
          %v1154 = vmul.f32 %v1058, %v1146
          %v1155 = vmul.f32 %v1147, 0.5
          %v1156 = vmul.f32 %v1148, 0.5
          %v1157 = vmul.f32 %v1149, 0.5
          %v1158 = vmul.f32 %v1150, 0.5
          %v1159 = vmul.f32 %v1151, 0.5
          %v1160 = vmul.f32 %v1152, 0.5
          %v1161 = vmul.f32 %v1153, 0.5
          %v1162 = vmul.f32 %v1154, 0.5
          %v1163 = vadd.f32 %v1131, %v1155
          %v1164 = vadd.f32 %v1132, %v1156
          %v1165 = vadd.f32 %v1133, %v1157
          %v1166 = vadd.f32 %v1134, %v1158
          %v1167 = vadd.f32 %v1135, %v1159
          %v1168 = vadd.f32 %v1136, %v1160
          %v1169 = vadd.f32 %v1137, %v1161
          %v1170 = vadd.f32 %v1138, %v1162
          %v1171 = vadd.f32 %v1163, %v1164
          %1172 = vadd.xlane.f32.xlu0 %v1171
          %v1173 = vpop.xlane.xlu0 %1172
          %v1174 = vadd.f32 %v1165, %v1166
          %1175 = vadd.xlane.f32.xlu0 %v1174
          %v1176 = vpop.xlane.xlu0 %1175
          %v1177 = vadd.f32 %v1167, %v1168
          %1178 = vadd.xlane.f32.xlu0 %v1177
          %v1179 = vpop.xlane.xlu0 %1178
          %v1180 = vadd.f32 %v1169, %v1170
          %1181 = vadd.xlane.f32.xlu0 %v1180
          %v1182 = vpop.xlane.xlu0 %1181
          %v1183 = vadd.f32 %v959, %v1173
          %v1184 = vadd.f32 %v960, %v1176
          %v1185 = vadd.f32 %v961, %v1179
          %v1186 = vadd.f32 %v962, %v1182
          %vm1187 = vcmask 48168
          %1188 = vst.msk [vmem:[#allocation2] sm:$0xff] %vm1187, %v1183
          %1189 = vst.msk [vmem:[#allocation2 + $0x8] sm:$0xff] %vm1187, %v1184
          %1190 = vst.msk [vmem:[#allocation2 + $0x10] sm:$0xff] %vm1187, %v1185
          %1191 = vst.msk [vmem:[#allocation2 + $0x18] sm:$0xff] %vm1187, %v1186
        $region72: #{tpu_custom_call.1} parent=47 // pred_fallthru
          _
        %p1192 = pnand %p955, %p639
        %p1193 = pneg %p1192
        // Predicated region
        $region73: #{tpu_custom_call.1} parent=47 // pred_check
          _
        $region74: #{tpu_custom_call.1} parent=47 // pred_check_branch
          %1195 = sbr.rel (%p1192) target = $region76
        $region75: #{tpu_custom_call.1} parent=47 // pred_region
          %v1196 = vld [vmem:[%s407] sm:$0xff]
          %v1197 = vld [vmem:[%s407 + $0x8] sm:$0xff]
          %v1198 = vld [vmem:[%s407 + $0x10] sm:$0xff]
          %v1199 = vld [vmem:[%s407 + $0x18] sm:$0xff]
          %vm1200 = vcmp.ne.s32.totalorder %v1196, 4294967196
          %vm1201 = vcmp.ne.s32.totalorder %v1197, 4294967196
          %vm1202 = vcmp.ne.s32.totalorder %v1198, 4294967196
          %vm1203 = vcmp.ne.s32.totalorder %v1199, 4294967196
          %v1204 = vld [vmem:[#allocation2] sm:$0xff]
          %v1205 = vld [vmem:[#allocation2 + $0x8] sm:$0xff]
          %v1206 = vld [vmem:[#allocation2 + $0x10] sm:$0xff]
          %v1207 = vld [vmem:[#allocation2 + $0x18] sm:$0xff]
          %v1208 = vlog2.pop %v1204
          %v1209 = vmul.f32 %v1208, 0.6931472
          %v1210 = vlog2.pop %v1205
          %v1211 = vmul.f32 %v1210, 0.6931472
          %v1212 = vlog2.pop %v1206
          %v1213 = vmul.f32 %v1212, 0.6931472
          %v1214 = vlog2.pop %v1207
          %v1215 = vmul.f32 %v1214, 0.6931472
          %1220 = vrot.lane.b32.xlu0 %v1209, 126
          %v1221 = vpop.permute.xlu0 %1220
          %1222 = vrot.lane.b32.xlu0 %v1211, 126
          %v1223 = vpop.permute.xlu0 %1222
          %1224 = vrot.lane.b32.xlu0 %v1213, 126
          %v1225 = vpop.permute.xlu0 %1224
          %1226 = vrot.lane.b32.xlu0 %v1215, 126
          %v1227 = vpop.permute.xlu0 %1226
          %v1232 = vadd.f32 %v1204, %v1221
          %v1233 = vadd.f32 %v1205, %v1223
          %v1234 = vadd.f32 %v1206, %v1225
          %v1235 = vadd.f32 %v1207, %v1227
          %1240 = vrot.lane.b32.xlu0 %v1232, 4
          %v1241 = vpop.permute.xlu0 %1240
          %1242 = vrot.lane.b32.xlu0 %v1233, 4
          %v1243 = vpop.permute.xlu0 %1242
          %1244 = vrot.lane.b32.xlu0 %v1234, 4
          %v1245 = vpop.permute.xlu0 %1244
          %1246 = vrot.lane.b32.xlu0 %v1235, 4
          %v1247 = vpop.permute.xlu0 %1246
          %v1252 = vsub.f32 %v1204, %v1241
          %v1253 = vsub.f32 %v1205, %v1243
          %v1254 = vsub.f32 %v1206, %v1245
          %v1255 = vsub.f32 %v1207, %v1247
          %v1256 = vsub.f32 0.0, %v1252
          %v1257 = vsub.f32 0.0, %v1253
          %v1258 = vsub.f32 0.0, %v1254
          %v1259 = vsub.f32 0.0, %v1255
          %1264 = vrot.lane.b32.xlu0 %v1256, 124
          %v1265 = vpop.permute.xlu0 %1264
          %1266 = vrot.lane.b32.xlu0 %v1257, 124
          %v1267 = vpop.permute.xlu0 %1266
          %1268 = vrot.lane.b32.xlu0 %v1258, 124
          %v1269 = vpop.permute.xlu0 %1268
          %1270 = vrot.lane.b32.xlu0 %v1259, 124
          %v1271 = vpop.permute.xlu0 %1270
          %v1276 = vsel %vm1200, %v1265, 0.0
          %v1277 = vsel %vm1201, %v1267, 0.0
          %v1278 = vsel %vm1202, %v1269, 0.0
          %v1279 = vsel %vm1203, %v1271, 0.0
          %vm1280 = vcmask 7168
          %v1281 = vsel %vm1280, %v1276, 0.0
          %v1282 = vsel %vm1280, %v1277, 0.0
          %v1283 = vadd.f32 %v1281, %v1282
          %v1284 = vsel %vm1280, %v1278, 0.0
          %v1285 = vadd.f32 %v1283, %v1284
          %v1286 = vsel %vm1280, %v1279, 0.0
          %v1287 = vadd.f32 %v1285, %v1286
          %1288 = vadd.xlane.f32.xlu0 %v1287
          %v1289 = vpop.xlane.xlu0 %1288
          %v1290 = vrot.slane %v1289, 4
          %v1291 = vadd.f32 %v1289, %v1290
          %v1292 = vrot.slane %v1291, 2
          %v1293 = vadd.f32 %v1291, %v1292
          %v1294 = vrot.slane %v1293, 1
          %v1295 = vadd.f32 %v1293, %v1294
          %s1296 = vtos %v1295
          %v1297 = vstv %s1296
          %1302 = vrot.lane.b32.xlu0 %v1204, 123
          %v1303 = vpop.permute.xlu0 %1302
          %1304 = vrot.lane.b32.xlu0 %v1205, 123
          %v1305 = vpop.permute.xlu0 %1304
          %1306 = vrot.lane.b32.xlu0 %v1206, 123
          %v1307 = vpop.permute.xlu0 %1306
          %1308 = vrot.lane.b32.xlu0 %v1207, 123
          %v1309 = vpop.permute.xlu0 %1308
          %v1314 = vsel %vm1280, %v1303, 0.0
          %v1315 = vsel %vm1280, %v1305, 0.0
          %v1316 = vadd.f32 %v1314, %v1315
          %v1317 = vsel %vm1280, %v1307, 0.0
          %v1318 = vadd.f32 %v1316, %v1317
          %v1319 = vsel %vm1280, %v1309, 0.0
          %v1320 = vadd.f32 %v1318, %v1319
          %1321 = vadd.xlane.f32.xlu0 %v1320
          %v1322 = vpop.xlane.xlu0 %1321
          %v1323 = vrot.slane %v1322, 4
          %v1324 = vadd.f32 %v1322, %v1323
          %v1325 = vrot.slane %v1324, 2
          %v1326 = vadd.f32 %v1324, %v1325
          %v1327 = vrot.slane %v1326, 1
          %v1328 = vadd.f32 %v1326, %v1327
          %s1329 = vtos %v1328
          %v1330 = vstv %s1329
          %v1331 = vmul.f32 %v1297, 0.5
          %v1332 = vmul.f32 %v1330, 0.5
          %v1333 = vadd.f32 %v1331, %v1332
          %v1334 = vmul.f32 %v1333, 0.03125
          %vm1335 = vcmp.eq.s32.totalorder %v632, 0
          %v1336 = vsel %vm1335, %v1334, 0.0
          %1337 = vst [vmem:[#allocation9] sm:$0x1] %v1336
        $region76: #{tpu_custom_call.1} parent=47 // pred_fallthru
          _
        // Predicated region
        $region77: #{tpu_custom_call.1} parent=47 // pred_check
          %p1338 = pneg %p240
        $region78: #{tpu_custom_call.1} parent=47 // pred_check_branch
          %1340 = sbr.rel (%p1338) target = $region80
        $region79: #{tpu_custom_call.1} parent=47 // pred_region
          %1342 = vsyncadd [#allocation5], 0
          %s1343 = scalar_lea.hbm %s7, %s26
          %s1345 = sshll.u32 [#allocation9], 4
          %s1346 = int_to_ptr.vmem [resolvable:$true] %s1345
          %s1347 = sshll.u32 %s1343, 4
          %s1348 = int_to_ptr.hbm [resolvable:$true] %s1347
          %1350 = dma.vmem_to_hbm [thread:$0]  %s1346, 16, %s1348, [#allocation5]
        $region80: #{tpu_custom_call.1} parent=47 // pred_fallthru
          _
        // Predicated region
        $region81: #{tpu_custom_call.1} parent=47 // pred_check
          %p1351 = pneg %p240
        $region82: #{tpu_custom_call.1} parent=47 // pred_check_branch
          %1353 = sbr.rel (%p1351) target = $region84
        $region83: #{tpu_custom_call.1} parent=47 // pred_region
          %1355 = dma.done [#allocation5], 16
        $region84: #{tpu_custom_call.1} parent=47 // pred_fallthru
          _
      $region48: #{tpu_custom_call.1} parent=5 // pred_fallthru
        _
      %p1356 = scmp.le.s32.totalorder 2, %s16
      // Predicated region
      $region85: #{tpu_custom_call.1} parent=5 // pred_check
        %p1357 = pneg %p1356
      $region86: #{tpu_custom_call.1} parent=5 // pred_check_branch
        %1359 = sbr.rel (%p1357) target = $region88
      $region87: #{tpu_custom_call.1} parent=5 // pred_region
        %s1360 = ssub.s32 %s16, 2
      $region88: #{tpu_custom_call.1} parent=5 // pred_fallthru
        _
    $region6: #{tpu_custom_call.1} parent=1 // loop_footer
      %s20 = sadd.s32 1, %s16
    $region7: #{tpu_custom_call.1} parent=1 // loop_footer_branch
      %15 = sbr.rel target = $region3
    $region8: #{tpu_custom_call.1} parent=1 // loop_exit
      _
    %1361 = vsyncpa [#allocation4], 1
    %s1362 = scalar_lea.sflag [#allocation4], 1
    %1363 = vsyncpa %s1362, 1
    %1364 = vsyncpa [#allocation7], 1
    %1365 = vsyncpa [#allocation5], 1
    %s1366 = scalar_lea.sflag [#allocation5], 1
    %1367 = vsyncpa %s1366, 1

</llo_original>
